<compile_context>
chip_gen: v7x
topology: tpu7x:2x2x1
jax: 0.10.0
libtpu: 0.0.40
codegen_flags: <defaults>
</compile_context>

<pallas_src>
import functools
import math

import jax
import jax.numpy as jnp
from jax import lax
from jax.experimental import pallas as pl
from jax.experimental.pallas import tpu as pltpu

HEAD_SLOT = 128   # lane-aligned slot width per head inside the proj / ctx slabs


def _news_encoder_kernel(x_ref, mkey_ref, mtok_ref,
                         wqkv_ref, bqkv_ref,
                         wa1_ref, ba1_ref, wa2_ref, ba2_ref,
                         wr_ref, br_ref,
                         out_ref, proj_ref, ctx_ref,
                         *, TB, S, H, off_k, off_v):
    """One grid step: TB batch elements, all H heads.

    x_ref    : (TB*S, d_model) f32     flattened BERT hidden states
    mkey_ref : (TB, 1, S) f32          0/1 token mask (key axis, MHA)
    mtok_ref : (TB*S, 1) f32           0/1 token mask (per token, additive attn)
    wqkv_ref : (d_model, 3*H*128) bf16 packed [W_Q/sqrt(d_k) | W_K | W_V],
                                       one 128-lane slot per head, zero padded
    bqkv_ref : (1, 3*H*128) f32
    wa1_ref  : (H*128, att_hidden) bf16  AdditiveAttention fc1 (zero-padded rows)
    ba1_ref  : (1, att_hidden) f32
    wa2_ref  : (1, att_hidden) f32       AdditiveAttention fc2 as a row vector
    ba2_ref  : (1, 1) f32
    wr_ref   : (H*128, news_dim) bf16    reduce_dim_linear (zero-padded rows)
    br_ref   : (1, news_dim) f32
    out_ref  : (TB, news_dim) f32
    proj_ref : (TB*S, 3*H*128) f32  VMEM scratch, fused Q|K|V projection
    ctx_ref  : (TB*S, H*128) f32    VMEM scratch, per-head attention context
    """
    HP = H * HEAD_SLOT

    # ---- fused Q/K/V projection for all heads: one wide bf16 MXU matmul -----
    x = x_ref[...].astype(jnp.bfloat16)
    proj_ref[...] = jnp.dot(x, wqkv_ref[...],
                            preferred_element_type=jnp.float32) + bqkv_ref[...]

    # ---- scaled-dot-product attention (exp / mask / sum normalization) ------
    # fori_loop over the batch tile bounds the live working set to one batch
    # element; the H inner matmuls stay unrolled (H is small).
    def attend_one_batch(b, carry):
        r0 = pl.multiple_of(b * S, S)
        mask_row = mkey_ref[b]                       # (1, S) -> broadcast over queries
        for h in range(H):
            q = proj_ref[pl.ds(r0, S),
                         h * HEAD_SLOT:(h + 1) * HEAD_SLOT].astype(jnp.bfloat16)
            k = proj_ref[pl.ds(r0, S),
                         off_k + h * HEAD_SLOT:off_k + (h + 1) * HEAD_SLOT
                         ].astype(jnp.bfloat16)
            v = proj_ref[pl.ds(r0, S),
                         off_v + h * HEAD_SLOT:off_v + (h + 1) * HEAD_SLOT
                         ].astype(jnp.bfloat16)
            # padded lanes (d_k..127 / d_v..127) are exactly zero, so they
            # contribute nothing to q.k or attn.v.
            sc = lax.dot_general(q, k, (((1,), (1,)), ((), ())),
                                 preferred_element_type=jnp.float32)   # (S, S)
            sc = jnp.exp(sc) * mask_row
            inv = pl.reciprocal(jnp.sum(sc, axis=-1, keepdims=True) + 1e-8,
                                approx=True)
            attn = (sc * inv).astype(jnp.bfloat16)
            ctx_ref[pl.ds(r0, S), h * HEAD_SLOT:(h + 1) * HEAD_SLOT] = jnp.dot(
                attn, v, preferred_element_type=jnp.float32)            # (S, 128)
        return carry

    lax.fori_loop(0, TB, attend_one_batch, 0)

    # ---- AdditiveAttention pooling over the sequence (all heads fused) ------
    ctx = ctx_ref[...]                                       # (TB*S, H*128) f32
    e = jnp.tanh(jnp.dot(ctx.astype(jnp.bfloat16), wa1_ref[...],
                         preferred_element_type=jnp.float32) + ba1_ref[...])
    # fc2 has a single output column -> VPU multiply + lane reduce, not an
    # N=1 MXU pass.
    alpha = jnp.exp(jnp.sum(e * wa2_ref[...], axis=-1, keepdims=True)
                    + ba2_ref[...])
    alpha = alpha * mtok_ref[...]                            # (TB*S, 1)

    # per-batch segment sums via reshape + sum (no O(TB^2*S) seg matmul)
    pooled = jnp.sum((ctx * alpha).reshape(TB, S, HP), axis=1)   # (TB, H*128)
    denom = jnp.sum(alpha.reshape(TB, S, 1), axis=1) + 1e-8      # (TB, 1)

    # ---- fused (weighted pooling @ reduce_dim_linear) ------------------------
    news_lin = jnp.dot(pooled.astype(jnp.bfloat16), wr_ref[...],
                       preferred_element_type=jnp.float32)       # (TB, news_dim)
    out_ref[...] = news_lin * pl.reciprocal(denom, approx=True) + br_ref[...]


def news_encoder_forward(last_hidden_states, token_mask, params, *,
                         n_heads, d_k, d_v, batch_tile=None):
    """NewsEncoder forward (bus_num=0, seg_num=1, single text attribute),
    starting from the BERT backbone output.

    last_hidden_states : (B, S, d_model) f32   (B = batch_size * seg_num)
    token_mask         : (B, S) 0/1
    returns            : (B, news_dim) f32
    """
    B, S, d_model = last_hidden_states.shape
    H = n_heads
    HP = H * HEAD_SLOT
    assert d_k <= HEAD_SLOT and d_v <= HEAD_SLOT

    Wq, bq = params["W_Q_w"], params["W_Q_b"]
    Wk, bk = params["W_K_w"], params["W_K_b"]
    Wv, bv = params["W_V_w"], params["W_V_b"]
    Wa1, ba1 = params["att_fc1_w"], params["att_fc1_b"]   # (att_hidden, H*d_v), (att_hidden,)
    wa2, ba2 = params["att_fc2_w"], params["att_fc2_b"]   # (1, att_hidden), (1,)
    Wr, br = params["reduce_w"], params["reduce_b"]       # (news_dim, H*d_v), (news_dim,)
    att_hidden = Wa1.shape[0]
    news_dim = Wr.shape[0]

    # -- pack Q|K|V: one 128-lane slot per head (lane-aligned per-head slices
    #    in-kernel, zero-padded lanes contribute nothing); fold 1/sqrt(d_k)
    #    into the Q weights/bias.
    scale = 1.0 / math.sqrt(d_k)
    off_k, off_v = HP, 2 * HP
    Wtot = 3 * HP
    Wp = jnp.zeros((d_model, Wtot), jnp.float32)
    bp = jnp.zeros((1, Wtot), jnp.float32)
    WqT, WkT, WvT = Wq.T, Wk.T, Wv.T
    for h in range(H):
        q0 = h * HEAD_SLOT
        k0 = off_k + h * HEAD_SLOT
        v0 = off_v + h * HEAD_SLOT
        Wp = Wp.at[:, q0:q0 + d_k].set(WqT[:, h * d_k:(h + 1) * d_k] * scale)
        bp = bp.at[:, q0:q0 + d_k].set(bq[None, h * d_k:(h + 1) * d_k] * scale)
        Wp = Wp.at[:, k0:k0 + d_k].set(WkT[:, h * d_k:(h + 1) * d_k])
        bp = bp.at[:, k0:k0 + d_k].set(bk[None, h * d_k:(h + 1) * d_k])
        Wp = Wp.at[:, v0:v0 + d_v].set(WvT[:, h * d_v:(h + 1) * d_v])
        bp = bp.at[:, v0:v0 + d_v].set(bv[None, h * d_v:(h + 1) * d_v])

    # -- zero-row-padded per-head slabs so fc1 / reduce_dim_linear become one
    #    wide matmul each against the (TB*S, H*128) ctx slab.
    Wa1p = jnp.zeros((HP, att_hidden), jnp.float32)
    Wrp = jnp.zeros((HP, news_dim), jnp.float32)
    Wa1T, WrT = Wa1.T, Wr.T
    for h in range(H):
        r0 = h * HEAD_SLOT
        Wa1p = Wa1p.at[r0:r0 + d_v, :].set(Wa1T[h * d_v:(h + 1) * d_v, :])
        Wrp = Wrp.at[r0:r0 + d_v, :].set(WrT[h * d_v:(h + 1) * d_v, :])

    # MXU operands in bf16 (f32 accumulation in-kernel); biases stay f32.
    Wp = Wp.astype(jnp.bfloat16)
    Wa1p = Wa1p.astype(jnp.bfloat16)
    Wrp = Wrp.astype(jnp.bfloat16)
    ba1r = ba1[None, :]
    wa2row = wa2.astype(jnp.float32)               # (1, att_hidden) row vector
    ba2r = ba2.reshape(1, 1)
    brr = br[None, :]

    x2d = last_hidden_states.reshape(B * S, d_model)
    mask_key = token_mask.reshape(B, 1, S).astype(jnp.float32)
    mask_tok = token_mask.reshape(B * S, 1).astype(jnp.float32)

    if batch_tile is None:
        batch_tile = B
        if B >= 16 and B % 16 == 0:
            # v7x has 2 TensorCores: give the "parallel" grid >= 2 steps, and
            # keep the per-step activation slabs (x + proj + ctx) comfortably
            # inside v7x's 64 MiB VMEM.
            batch_tile = B // 2
            row_bytes = 4 * (d_model + Wtot + HP)
            while batch_tile % 16 == 0 and batch_tile * S * row_bytes > (24 << 20):
                batch_tile //= 2
    TB = batch_tile
    assert B % TB == 0, "batch_tile must divide B"
    assert TB == B or (TB % 8 == 0 and (TB * S) % 8 == 0), \
        "partial batch tiles must keep sublane-aligned blocks"
    grid = (B // TB,)

    # Working-set estimate -> raise the scoped-VMEM limit when scaling TB up
    # (v5e default is ~16 MiB); cap below v7x's 64 MiB physical VMEM.
    weight_bytes = (d_model * Wtot * 2 + Wtot * 4
                    + HP * att_hidden * 2 + att_hidden * 4
                    + att_hidden * 4 + 4
                    + HP * news_dim * 2 + news_dim * 4)
    act_block_bytes = (TB * S * d_model + 2 * TB * S + TB * news_dim) * 4
    scratch_bytes = TB * S * (Wtot + HP) * 4
    vmem_est = 2 * (act_block_bytes + weight_bytes) + scratch_bytes
    vmem_limit = int(min(max(32 << 20, (vmem_est * 3) // 2), 48 << 20))

    kernel = functools.partial(_news_encoder_kernel, TB=TB, S=S, H=H,
                               off_k=off_k, off_v=off_v)

    return pl.pallas_call(
        kernel,
        out_shape=jax.ShapeDtypeStruct((B, news_dim), jnp.float32),
        grid=grid,
        in_specs=[
            pl.BlockSpec((TB * S, d_model), lambda i: (i, 0)),   # hidden states
            pl.BlockSpec((TB, 1, S), lambda i: (i, 0, 0)),       # key mask (MHA)
            pl.BlockSpec((TB * S, 1), lambda i: (i, 0)),         # token mask (additive)
            # grid-invariant weights (index_map -> (0, ...)): fetched once, the
            # pipeliner does not re-DMA them across steps.  (pl.Buffered(1)
            # would additionally drop their second VMEM buffer; omitted for
            # portability across Pallas versions.)
            pl.BlockSpec((d_model, Wtot), lambda i: (0, 0)),     # packed W_QKV (bf16)
            pl.BlockSpec((1, Wtot), lambda i: (0, 0)),
            pl.BlockSpec((HP, att_hidden), lambda i: (0, 0)),    # fc1 slab (bf16)
            pl.BlockSpec((1, att_hidden), lambda i: (0, 0)),
            pl.BlockSpec((1, att_hidden), lambda i: (0, 0)),     # fc2 row vector
            pl.BlockSpec((1, 1), lambda i: (0, 0)),
            pl.BlockSpec((HP, news_dim), lambda i: (0, 0)),      # reduce slab (bf16)
            pl.BlockSpec((1, news_dim), lambda i: (0, 0)),
        ],
        out_specs=pl.BlockSpec((TB, news_dim), lambda i: (i, 0)),
        scratch_shapes=[pltpu.VMEM((TB * S, Wtot), jnp.float32),
                        pltpu.VMEM((TB * S, HP), jnp.float32)],
        compiler_params=pltpu.CompilerParams(
            dimension_semantics=("parallel",),
            vmem_limit_bytes=vmem_limit),
    )(x2d, mask_key, mask_tok, Wp, bp, Wa1p, ba1r, wa2row, ba2r, Wrp, brr)


def init_params(key, d_model, n_heads, d_k, d_v, att_hidden, news_dim):
    """Deterministic parameters in PyTorch nn.Linear layout (W: (out, in))."""
    ks = jax.random.split(key, 12)

    def xavier(k, fan_out, fan_in):              # nn.init.xavier_uniform_
        bound = math.sqrt(6.0 / (fan_in + fan_out))
        return jax.random.uniform(k, (fan_out, fan_in), jnp.float32, -bound, bound)

    def lin_bias(k, fan_in, n):                  # default nn.Linear bias init
        bound = 1.0 / math.sqrt(fan_in)
        return jax.random.uniform(k, (n,), jnp.float32, -bound, bound)

    D2 = n_heads * d_v
    return {
        "W_Q_w": xavier(ks[0], n_heads * d_k, d_model),
        "W_Q_b": lin_bias(ks[1], d_model, n_heads * d_k),
        "W_K_w": xavier(ks[2], n_heads * d_k, d_model),
        "W_K_b": lin_bias(ks[3], d_model, n_heads * d_k),
        "W_V_w": xavier(ks[4], n_heads * d_v, d_model),
        "W_V_b": lin_bias(ks[5], d_model, n_heads * d_v),
        "att_fc1_w": xavier(ks[6], att_hidden, D2),
        "att_fc1_b": lin_bias(ks[7], D2, att_hidden),
        "att_fc2_w": xavier(ks[8], 1, att_hidden),
        "att_fc2_b": lin_bias(ks[9], att_hidden, 1),
        "reduce_w": xavier(ks[10], news_dim, D2),
        "reduce_b": lin_bias(ks[11], D2, news_dim),
    }


def _reference(last_hidden_states, token_mask, params, n_heads, d_k, d_v):
    """Pure-JAX mirror of the PyTorch forward (eval mode) for verification."""
    B, S, _ = last_hidden_states.shape
    H = n_heads

    def linear(x, W, b):
        return jnp.matmul(x, W.T) + b

    with jax.default_matmul_precision("highest"):
        # MultiHeadAttention (self-attention over tokens)
        q_s = linear(last_hidden_states, params["W_Q_w"], params["W_Q_b"]
                     ).reshape(B, S, H, d_k).transpose(0, 2, 1, 3)
        k_s = linear(last_hidden_states, params["W_K_w"], params["W_K_b"]
                     ).reshape(B, S, H, d_k).transpose(0, 2, 1, 3)
        v_s = linear(last_hidden_states, params["W_V_w"], params["W_V_b"]
                     ).reshape(B, S, H, d_v).transpose(0, 2, 1, 3)
        scores = jnp.einsum("bhqd,bhkd->bhqk", q_s, k_s) / math.sqrt(d_k)
        scores = jnp.exp(scores) * token_mask[:, None, None, :]
        attn = scores / (jnp.sum(scores, axis=-1, keepdims=True) + 1e-8)
        ctx = jnp.einsum("bhqk,bhkd->bhqd", attn, v_s)
        ctx = ctx.transpose(0, 2, 1, 3).reshape(B, S, H * d_v)
        # AdditiveAttention over the sequence
        e = jnp.tanh(linear(ctx, params["att_fc1_w"], params["att_fc1_b"]))
        alpha = jnp.exp(linear(e, params["att_fc2_w"], params["att_fc2_b"]))
        alpha = alpha * token_mask[:, :, None]
        alpha = alpha / (jnp.sum(alpha, axis=1, keepdims=True) + 1e-8)
        pooled = jnp.sum(ctx * alpha, axis=1)
        # reduce_dim_linear
        return linear(pooled, params["reduce_w"], params["reduce_b"])


if __name__ == "__main__":
    # Small config consistent with the module: batch_size=2, seg_num=1,
    # seq_length=8, word_embedding_dim=32, num_attention_heads=4,
    # d_k=d_v=20 (hardcoded in TextEncoder), news_query_vector_dim=32, news_dim=32.
    B, S = 2, 8
    d_model = 32
    n_heads, d_k, d_v = 4, 20, 20
    att_hidden = 32
    news_dim = 32

    key = jax.random.PRNGKey(0)
    kh, km, kp = jax.random.split(key, 3)
    last_hidden_states = jax.random.normal(kh, (B, S, d_model), jnp.float32)
    token_mask = (jax.random.uniform(km, (B, S)) > 0.2).astype(jnp.float32)
    params = init_params(kp, d_model, n_heads, d_k, d_v, att_hidden, news_dim)

    out = news_encoder_forward(last_hidden_states, token_mask, params,
                               n_heads=n_heads, d_k=d_k, d_v=d_v)
    out = jax.block_until_ready(out)

    ref = _reference(last_hidden_states, token_mask, params, n_heads, d_k, d_v)
    assert out.shape == (B, news_dim)
    err = float(jnp.max(jnp.abs(out - ref)))
    # bf16 MXU operands + approx reciprocals vs an f32 "highest" reference:
    # tolerance sized for bf16 (rel ~2^-9 per operand across a 4-matmul chain).
    assert jnp.allclose(out, ref, atol=5e-2, rtol=5e-2), \
        f"mismatch vs JAX reference, max abs err = {err}"
    print("KERNEL_OK")
</pallas_src>

<mosaic_0001>
module attributes {stable_mosaic.version = 11 : i64} {
  func.func @_news_encoder_kernel(%arg0: i32, %arg1: memref<16x32xf32, #tpu.memory_space<vmem>>, %arg2: memref<2x1x8xf32, #tpu.memory_space<vmem>>, %arg3: memref<16x1xf32, #tpu.memory_space<vmem>>, %arg4: memref<32x1536xbf16, #tpu.memory_space<vmem>>, %arg5: memref<1x1536xf32, #tpu.memory_space<vmem>>, %arg6: memref<512x32xbf16, #tpu.memory_space<vmem>>, %arg7: memref<1x32xf32, #tpu.memory_space<vmem>>, %arg8: memref<1x32xf32, #tpu.memory_space<vmem>>, %arg9: memref<1x1xf32, #tpu.memory_space<vmem>>, %arg10: memref<512x32xbf16, #tpu.memory_space<vmem>>, %arg11: memref<1x32xf32, #tpu.memory_space<vmem>>, %arg12: memref<2x32xf32, #tpu.memory_space<vmem>>, %arg13: memref<16x1536xf32, #tpu.memory_space<vmem>>, %arg14: memref<16x512xf32, #tpu.memory_space<vmem>>) attributes {dimension_semantics = [#tpu.dimension_semantics<parallel>], iteration_bounds = array<i64: 1>, scalar_prefetch = 0 : i64, scratch_operands = 2 : i64, tpu.core_type = #tpu.core_type<tc>, window_params = [{transform_indices = @transform_0, window_bounds = array<i64: 16, 32>}, {transform_indices = @transform_1, window_bounds = array<i64: 2, 1, 8>}, {transform_indices = @transform_2, window_bounds = array<i64: 16, 1>}, {pipeline_mode = #tpu.pipeline_mode<synchronous>, transform_indices = @transform_3, window_bounds = array<i64: 32, 1536>}, {pipeline_mode = #tpu.pipeline_mode<synchronous>, transform_indices = @transform_4, window_bounds = array<i64: 1, 1536>}, {pipeline_mode = #tpu.pipeline_mode<synchronous>, transform_indices = @transform_5, window_bounds = array<i64: 512, 32>}, {pipeline_mode = #tpu.pipeline_mode<synchronous>, transform_indices = @transform_6, window_bounds = array<i64: 1, 32>}, {pipeline_mode = #tpu.pipeline_mode<synchronous>, transform_indices = @transform_7, window_bounds = array<i64: 1, 32>}, {pipeline_mode = #tpu.pipeline_mode<synchronous>, transform_indices = @transform_8, window_bounds = array<i64: 1, 1>}, {pipeline_mode = #tpu.pipeline_mode<synchronous>, transform_indices = @transform_9, window_bounds = array<i64: 512, 32>}, {pipeline_mode = #tpu.pipeline_mode<synchronous>, transform_indices = @transform_10, window_bounds = array<i64: 1, 32>}, {transform_indices = @transform_11, window_bounds = array<i64: 2, 32>}]} {
    %c0 = arith.constant 0 : index
    %c0_0 = arith.constant 0 : index
    %0 = vector.load %arg1[%c0, %c0_0] : memref<16x32xf32, #tpu.memory_space<vmem>>, vector<16x32xf32>
    %1 = arith.truncf %0 : vector<16x32xf32> to vector<16x32xbf16>
    %c0_1 = arith.constant 0 : index
    %c0_2 = arith.constant 0 : index
    %2 = vector.load %arg4[%c0_1, %c0_2] : memref<32x1536xbf16, #tpu.memory_space<vmem>>, vector<32x1536xbf16>
    %cst = arith.constant dense<0.000000e+00> : vector<16x1536xf32>
    %3 = tpu.matmul %1, %2, %cst {dimension_numbers = #tpu.dot_dimension_numbers<[1], [0], [0], [1], [0, 0, 1, 1], [], []>} : vector<16x32xbf16>, vector<32x1536xbf16>, vector<16x1536xf32> -> vector<16x1536xf32>
    %c0_3 = arith.constant 0 : index
    %c0_4 = arith.constant 0 : index
    %4 = vector.load %arg5[%c0_3, %c0_4] : memref<1x1536xf32, #tpu.memory_space<vmem>>, vector<1x1536xf32>
    %5 = vector.broadcast %4 : vector<1x1536xf32> to vector<16x1536xf32>
    %6 = arith.addf %3, %5 : vector<16x1536xf32>
    %c0_5 = arith.constant 0 : index
    %c0_6 = arith.constant 0 : index
    %7 = vector.load %arg13[%c0_5, %c0_6] : memref<16x1536xf32, #tpu.memory_space<vmem>>, vector<16x1536xf32>
    tpu.vector_store %arg13[%c0_5, %c0_6], %6 {strides = array<i32>} : memref<16x1536xf32, #tpu.memory_space<vmem>>, vector<16x1536xf32>,
    %c0_i32 = arith.constant 0 : i32
    %c2_i32 = arith.constant 2 : i32
    %8 = arith.addi %c0_i32, %c2_i32 : i32
    %c1_i32 = arith.constant 1 : i32
    scf.for %arg15 = %c0_i32 to %8 step %c1_i32  : i32 {
      %c8_i32 = arith.constant 8 : i32
      %46 = arith.muli %arg15, %c8_i32 : i32
      %47 = tpu.assume_multiple %46, 8 : i32
      %48 = arith.index_cast %arg15 : i32 to index
      %c0_32 = arith.constant 0 : index
      %c0_33 = arith.constant 0 : index
      %49 = vector.load %arg2[%48, %c0_32, %c0_33] : memref<2x1x8xf32, #tpu.memory_space<vmem>>, vector<1x1x8xf32>
      %50 = vector.shape_cast %49 : vector<1x1x8xf32> to vector<1x8xf32>
      %51 = arith.index_cast %47 : i32 to index
      %c0_34 = arith.constant 0 : index
      %52 = vector.load %arg13[%51, %c0_34] : memref<16x1536xf32, #tpu.memory_space<vmem>>, vector<8x128xf32>
      %53 = arith.truncf %52 : vector<8x128xf32> to vector<8x128xbf16>
      %54 = arith.index_cast %47 : i32 to index
      %c512 = arith.constant 512 : index
      %55 = vector.load %arg13[%54, %c512] : memref<16x1536xf32, #tpu.memory_space<vmem>>, vector<8x128xf32>
      %56 = arith.truncf %55 : vector<8x128xf32> to vector<8x128xbf16>
      %57 = arith.index_cast %47 : i32 to index
      %c1024 = arith.constant 1024 : index
      %58 = vector.load %arg13[%57, %c1024] : memref<16x1536xf32, #tpu.memory_space<vmem>>, vector<8x128xf32>
      %59 = arith.truncf %58 : vector<8x128xf32> to vector<8x128xbf16>
      %cst_35 = arith.constant dense<0.000000e+00> : vector<8x8xf32>
      %60 = tpu.matmul %53, %56, %cst_35 {dimension_numbers = #tpu.dot_dimension_numbers<[1], [1], [0], [0], [0, 0, 1, 0], [], []>} : vector<8x128xbf16>, vector<8x128xbf16>, vector<8x8xf32> -> vector<8x8xf32>
      %61 = math.exp %60 : vector<8x8xf32>
      %62 = vector.broadcast %50 : vector<1x8xf32> to vector<8x8xf32>
      %63 = arith.mulf %61, %62 : vector<8x8xf32>
      %cst_36 = arith.constant dense<0.000000e+00> : vector<8xf32>
      %64 = vector.multi_reduction <add>, %63, %cst_36 [1] : vector<8x8xf32> to vector<8xf32>
      %65 = vector.shape_cast %64 : vector<8xf32> to vector<8x1xf32>
      %cst_37 = arith.constant 9.99999993E-9 : f32
      %66 = vector.broadcast %cst_37 : f32 to vector<8x1xf32>
      %67 = arith.addf %65, %66 : vector<8x1xf32>
      %68 = tpu.reciprocal %67 {approx = true} : vector<8x1xf32> -> vector<8x1xf32>
      %69 = vector.broadcast %68 : vector<8x1xf32> to vector<8x8xf32>
      %70 = arith.mulf %63, %69 : vector<8x8xf32>
      %71 = arith.truncf %70 : vector<8x8xf32> to vector<8x8xbf16>
      %cst_38 = arith.constant dense<0.000000e+00> : vector<8x128xf32>
      %72 = tpu.matmul %71, %59, %cst_38 {dimension_numbers = #tpu.dot_dimension_numbers<[1], [0], [0], [1], [0, 0, 1, 1], [], []>} : vector<8x8xbf16>, vector<8x128xbf16>, vector<8x128xf32> -> vector<8x128xf32>
      %73 = arith.index_cast %47 : i32 to index
      %c0_39 = arith.constant 0 : index
      %74 = vector.load %arg14[%73, %c0_39] : memref<16x512xf32, #tpu.memory_space<vmem>>, vector<8x128xf32>
      tpu.vector_store %arg14[%73, %c0_39], %72 {strides = array<i32>} : memref<16x512xf32, #tpu.memory_space<vmem>>, vector<8x128xf32>,
      %75 = arith.index_cast %47 : i32 to index
      %c128 = arith.constant 128 : index
      %76 = vector.load %arg13[%75, %c128] : memref<16x1536xf32, #tpu.memory_space<vmem>>, vector<8x128xf32>
      %77 = arith.truncf %76 : vector<8x128xf32> to vector<8x128xbf16>
      %78 = arith.index_cast %47 : i32 to index
      %c640 = arith.constant 640 : index
      %79 = vector.load %arg13[%78, %c640] : memref<16x1536xf32, #tpu.memory_space<vmem>>, vector<8x128xf32>
      %80 = arith.truncf %79 : vector<8x128xf32> to vector<8x128xbf16>
      %81 = arith.index_cast %47 : i32 to index
      %c1152 = arith.constant 1152 : index
      %82 = vector.load %arg13[%81, %c1152] : memref<16x1536xf32, #tpu.memory_space<vmem>>, vector<8x128xf32>
      %83 = arith.truncf %82 : vector<8x128xf32> to vector<8x128xbf16>
      %cst_40 = arith.constant dense<0.000000e+00> : vector<8x8xf32>
      %84 = tpu.matmul %77, %80, %cst_40 {dimension_numbers = #tpu.dot_dimension_numbers<[1], [1], [0], [0], [0, 0, 1, 0], [], []>} : vector<8x128xbf16>, vector<8x128xbf16>, vector<8x8xf32> -> vector<8x8xf32>
      %85 = math.exp %84 : vector<8x8xf32>
      %86 = vector.broadcast %50 : vector<1x8xf32> to vector<8x8xf32>
      %87 = arith.mulf %85, %86 : vector<8x8xf32>
      %cst_41 = arith.constant dense<0.000000e+00> : vector<8xf32>
      %88 = vector.multi_reduction <add>, %87, %cst_41 [1] : vector<8x8xf32> to vector<8xf32>
      %89 = vector.shape_cast %88 : vector<8xf32> to vector<8x1xf32>
      %cst_42 = arith.constant 9.99999993E-9 : f32
      %90 = vector.broadcast %cst_42 : f32 to vector<8x1xf32>
      %91 = arith.addf %89, %90 : vector<8x1xf32>
      %92 = tpu.reciprocal %91 {approx = true} : vector<8x1xf32> -> vector<8x1xf32>
      %93 = vector.broadcast %92 : vector<8x1xf32> to vector<8x8xf32>
      %94 = arith.mulf %87, %93 : vector<8x8xf32>
      %95 = arith.truncf %94 : vector<8x8xf32> to vector<8x8xbf16>
      %cst_43 = arith.constant dense<0.000000e+00> : vector<8x128xf32>
      %96 = tpu.matmul %95, %83, %cst_43 {dimension_numbers = #tpu.dot_dimension_numbers<[1], [0], [0], [1], [0, 0, 1, 1], [], []>} : vector<8x8xbf16>, vector<8x128xbf16>, vector<8x128xf32> -> vector<8x128xf32>
      %97 = arith.index_cast %47 : i32 to index
      %c128_44 = arith.constant 128 : index
      %98 = vector.load %arg14[%97, %c128_44] : memref<16x512xf32, #tpu.memory_space<vmem>>, vector<8x128xf32>
      tpu.vector_store %arg14[%97, %c128_44], %96 {strides = array<i32>} : memref<16x512xf32, #tpu.memory_space<vmem>>, vector<8x128xf32>,
      %99 = arith.index_cast %47 : i32 to index
      %c256 = arith.constant 256 : index
      %100 = vector.load %arg13[%99, %c256] : memref<16x1536xf32, #tpu.memory_space<vmem>>, vector<8x128xf32>
      %101 = arith.truncf %100 : vector<8x128xf32> to vector<8x128xbf16>
      %102 = arith.index_cast %47 : i32 to index
      %c768 = arith.constant 768 : index
      %103 = vector.load %arg13[%102, %c768] : memref<16x1536xf32, #tpu.memory_space<vmem>>, vector<8x128xf32>
      %104 = arith.truncf %103 : vector<8x128xf32> to vector<8x128xbf16>
      %105 = arith.index_cast %47 : i32 to index
      %c1280 = arith.constant 1280 : index
      %106 = vector.load %arg13[%105, %c1280] : memref<16x1536xf32, #tpu.memory_space<vmem>>, vector<8x128xf32>
      %107 = arith.truncf %106 : vector<8x128xf32> to vector<8x128xbf16>
      %cst_45 = arith.constant dense<0.000000e+00> : vector<8x8xf32>
      %108 = tpu.matmul %101, %104, %cst_45 {dimension_numbers = #tpu.dot_dimension_numbers<[1], [1], [0], [0], [0, 0, 1, 0], [], []>} : vector<8x128xbf16>, vector<8x128xbf16>, vector<8x8xf32> -> vector<8x8xf32>
      %109 = math.exp %108 : vector<8x8xf32>
      %110 = vector.broadcast %50 : vector<1x8xf32> to vector<8x8xf32>
      %111 = arith.mulf %109, %110 : vector<8x8xf32>
      %cst_46 = arith.constant dense<0.000000e+00> : vector<8xf32>
      %112 = vector.multi_reduction <add>, %111, %cst_46 [1] : vector<8x8xf32> to vector<8xf32>
      %113 = vector.shape_cast %112 : vector<8xf32> to vector<8x1xf32>
      %cst_47 = arith.constant 9.99999993E-9 : f32
      %114 = vector.broadcast %cst_47 : f32 to vector<8x1xf32>
      %115 = arith.addf %113, %114 : vector<8x1xf32>
      %116 = tpu.reciprocal %115 {approx = true} : vector<8x1xf32> -> vector<8x1xf32>
      %117 = vector.broadcast %116 : vector<8x1xf32> to vector<8x8xf32>
      %118 = arith.mulf %111, %117 : vector<8x8xf32>
      %119 = arith.truncf %118 : vector<8x8xf32> to vector<8x8xbf16>
      %cst_48 = arith.constant dense<0.000000e+00> : vector<8x128xf32>
      %120 = tpu.matmul %119, %107, %cst_48 {dimension_numbers = #tpu.dot_dimension_numbers<[1], [0], [0], [1], [0, 0, 1, 1], [], []>} : vector<8x8xbf16>, vector<8x128xbf16>, vector<8x128xf32> -> vector<8x128xf32>
      %121 = arith.index_cast %47 : i32 to index
      %c256_49 = arith.constant 256 : index
      %122 = vector.load %arg14[%121, %c256_49] : memref<16x512xf32, #tpu.memory_space<vmem>>, vector<8x128xf32>
      tpu.vector_store %arg14[%121, %c256_49], %120 {strides = array<i32>} : memref<16x512xf32, #tpu.memory_space<vmem>>, vector<8x128xf32>,
      %123 = arith.index_cast %47 : i32 to index
      %c384 = arith.constant 384 : index
      %124 = vector.load %arg13[%123, %c384] : memref<16x1536xf32, #tpu.memory_space<vmem>>, vector<8x128xf32>
      %125 = arith.truncf %124 : vector<8x128xf32> to vector<8x128xbf16>
      %126 = arith.index_cast %47 : i32 to index
      %c896 = arith.constant 896 : index
      %127 = vector.load %arg13[%126, %c896] : memref<16x1536xf32, #tpu.memory_space<vmem>>, vector<8x128xf32>
      %128 = arith.truncf %127 : vector<8x128xf32> to vector<8x128xbf16>
      %129 = arith.index_cast %47 : i32 to index
      %c1408 = arith.constant 1408 : index
      %130 = vector.load %arg13[%129, %c1408] : memref<16x1536xf32, #tpu.memory_space<vmem>>, vector<8x128xf32>
      %131 = arith.truncf %130 : vector<8x128xf32> to vector<8x128xbf16>
      %cst_50 = arith.constant dense<0.000000e+00> : vector<8x8xf32>
      %132 = tpu.matmul %125, %128, %cst_50 {dimension_numbers = #tpu.dot_dimension_numbers<[1], [1], [0], [0], [0, 0, 1, 0], [], []>} : vector<8x128xbf16>, vector<8x128xbf16>, vector<8x8xf32> -> vector<8x8xf32>
      %133 = math.exp %132 : vector<8x8xf32>
      %134 = vector.broadcast %50 : vector<1x8xf32> to vector<8x8xf32>
      %135 = arith.mulf %133, %134 : vector<8x8xf32>
      %cst_51 = arith.constant dense<0.000000e+00> : vector<8xf32>
      %136 = vector.multi_reduction <add>, %135, %cst_51 [1] : vector<8x8xf32> to vector<8xf32>
      %137 = vector.shape_cast %136 : vector<8xf32> to vector<8x1xf32>
      %cst_52 = arith.constant 9.99999993E-9 : f32
      %138 = vector.broadcast %cst_52 : f32 to vector<8x1xf32>
      %139 = arith.addf %137, %138 : vector<8x1xf32>
      %140 = tpu.reciprocal %139 {approx = true} : vector<8x1xf32> -> vector<8x1xf32>
      %141 = vector.broadcast %140 : vector<8x1xf32> to vector<8x8xf32>
      %142 = arith.mulf %135, %141 : vector<8x8xf32>
      %143 = arith.truncf %142 : vector<8x8xf32> to vector<8x8xbf16>
      %cst_53 = arith.constant dense<0.000000e+00> : vector<8x128xf32>
      %144 = tpu.matmul %143, %131, %cst_53 {dimension_numbers = #tpu.dot_dimension_numbers<[1], [0], [0], [1], [0, 0, 1, 1], [], []>} : vector<8x8xbf16>, vector<8x128xbf16>, vector<8x128xf32> -> vector<8x128xf32>
      %145 = arith.index_cast %47 : i32 to index
      %c384_54 = arith.constant 384 : index
      %146 = vector.load %arg14[%145, %c384_54] : memref<16x512xf32, #tpu.memory_space<vmem>>, vector<8x128xf32>
      tpu.vector_store %arg14[%145, %c384_54], %144 {strides = array<i32>} : memref<16x512xf32, #tpu.memory_space<vmem>>, vector<8x128xf32>,
    }
    %c2_i32_7 = arith.constant 2 : i32
    %c0_8 = arith.constant 0 : index
    %c0_9 = arith.constant 0 : index
    %9 = vector.load %arg14[%c0_8, %c0_9] : memref<16x512xf32, #tpu.memory_space<vmem>>, vector<16x512xf32>
    %10 = arith.truncf %9 : vector<16x512xf32> to vector<16x512xbf16>
    %c0_10 = arith.constant 0 : index
    %c0_11 = arith.constant 0 : index
    %11 = vector.load %arg6[%c0_10, %c0_11] : memref<512x32xbf16, #tpu.memory_space<vmem>>, vector<512x32xbf16>
    %cst_12 = arith.constant dense<0.000000e+00> : vector<16x32xf32>
    %12 = tpu.matmul %10, %11, %cst_12 {dimension_numbers = #tpu.dot_dimension_numbers<[1], [0], [0], [1], [0, 0, 1, 1], [], []>} : vector<16x512xbf16>, vector<512x32xbf16>, vector<16x32xf32> -> vector<16x32xf32>
    %c0_13 = arith.constant 0 : index
    %c0_14 = arith.constant 0 : index
    %13 = vector.load %arg7[%c0_13, %c0_14] : memref<1x32xf32, #tpu.memory_space<vmem>>, vector<1x32xf32>
    %14 = vector.broadcast %13 : vector<1x32xf32> to vector<16x32xf32>
    %15 = arith.addf %12, %14 : vector<16x32xf32>
    %16 = math.tanh %15 : vector<16x32xf32>
    %c0_15 = arith.constant 0 : index
    %c0_16 = arith.constant 0 : index
    %17 = vector.load %arg8[%c0_15, %c0_16] : memref<1x32xf32, #tpu.memory_space<vmem>>, vector<1x32xf32>
    %18 = vector.broadcast %17 : vector<1x32xf32> to vector<16x32xf32>
    %19 = arith.mulf %16, %18 : vector<16x32xf32>
    %cst_17 = arith.constant dense<0.000000e+00> : vector<16xf32>
    %20 = vector.multi_reduction <add>, %19, %cst_17 [1] : vector<16x32xf32> to vector<16xf32>
    %21 = vector.shape_cast %20 : vector<16xf32> to vector<16x1xf32>
    %c0_18 = arith.constant 0 : index
    %c0_19 = arith.constant 0 : index
    %22 = vector.load %arg9[%c0_18, %c0_19] : memref<1x1xf32, #tpu.memory_space<vmem>>, vector<1x1xf32>
    %23 = vector.broadcast %22 : vector<1x1xf32> to vector<16x1xf32>
    %24 = arith.addf %21, %23 : vector<16x1xf32>
    %25 = math.exp %24 : vector<16x1xf32>
    %c0_20 = arith.constant 0 : index
    %c0_21 = arith.constant 0 : index
    %26 = vector.load %arg3[%c0_20, %c0_21] : memref<16x1xf32, #tpu.memory_space<vmem>>, vector<16x1xf32>
    %27 = arith.mulf %25, %26 : vector<16x1xf32>
    %28 = vector.broadcast %27 : vector<16x1xf32> to vector<16x512xf32>
    %29 = arith.mulf %9, %28 : vector<16x512xf32>
    %30 = vector.shape_cast %29 : vector<16x512xf32> to vector<2x8x512xf32>
    %cst_22 = arith.constant dense<0.000000e+00> : vector<2x512xf32>
    %31 = vector.multi_reduction <add>, %30, %cst_22 [1] : vector<2x8x512xf32> to vector<2x512xf32>
    %32 = vector.shape_cast %27 : vector<16x1xf32> to vector<2x8x1xf32>
    %cst_23 = arith.constant dense<0.000000e+00> : vector<2x1xf32>
    %33 = vector.multi_reduction <add>, %32, %cst_23 [1] : vector<2x8x1xf32> to vector<2x1xf32>
    %cst_24 = arith.constant 9.99999993E-9 : f32
    %34 = vector.broadcast %cst_24 : f32 to vector<2x1xf32>
    %35 = arith.addf %33, %34 : vector<2x1xf32>
    %36 = arith.truncf %31 : vector<2x512xf32> to vector<2x512xbf16>
    %c0_25 = arith.constant 0 : index
    %c0_26 = arith.constant 0 : index
    %37 = vector.load %arg10[%c0_25, %c0_26] : memref<512x32xbf16, #tpu.memory_space<vmem>>, vector<512x32xbf16>
    %cst_27 = arith.constant dense<0.000000e+00> : vector<2x32xf32>
    %38 = tpu.matmul %36, %37, %cst_27 {dimension_numbers = #tpu.dot_dimension_numbers<[1], [0], [0], [1], [0, 0, 1, 1], [], []>} : vector<2x512xbf16>, vector<512x32xbf16>, vector<2x32xf32> -> vector<2x32xf32>
    %39 = tpu.reciprocal %35 {approx = true} : vector<2x1xf32> -> vector<2x1xf32>
    %40 = vector.broadcast %39 : vector<2x1xf32> to vector<2x32xf32>
    %41 = arith.mulf %38, %40 : vector<2x32xf32>
    %c0_28 = arith.constant 0 : index
    %c0_29 = arith.constant 0 : index
    %42 = vector.load %arg11[%c0_28, %c0_29] : memref<1x32xf32, #tpu.memory_space<vmem>>, vector<1x32xf32>
    %43 = vector.broadcast %42 : vector<1x32xf32> to vector<2x32xf32>
    %44 = arith.addf %41, %43 : vector<2x32xf32>
    %c0_30 = arith.constant 0 : index
    %c0_31 = arith.constant 0 : index
    %45 = vector.load %arg12[%c0_30, %c0_31] : memref<2x32xf32, #tpu.memory_space<vmem>>, vector<2x32xf32>
    tpu.vector_store %arg12[%c0_30, %c0_31], %44 {strides = array<i32>} : memref<2x32xf32, #tpu.memory_space<vmem>>, vector<2x32xf32>,
    return
  }
  func.func @transform_0(%arg0: i32) -> (i32, i32) {
    %c0_i32 = arith.constant 0 : i32
    %c0_i32_0 = arith.constant 0 : i32
    return %arg0, %c0_i32 : i32, i32
  }
  func.func @transform_1(%arg0: i32) -> (i32, i32, i32) {
    %c0_i32 = arith.constant 0 : i32
    %c0_i32_0 = arith.constant 0 : i32
    %c0_i32_1 = arith.constant 0 : i32
    return %arg0, %c0_i32, %c0_i32_0 : i32, i32, i32
  }
  func.func @transform_2(%arg0: i32) -> (i32, i32) {
    %c0_i32 = arith.constant 0 : i32
    %c0_i32_0 = arith.constant 0 : i32
    return %arg0, %c0_i32 : i32, i32
  }
  func.func @transform_3(%arg0: i32) -> (i32, i32) {
    %c0_i32 = arith.constant 0 : i32
    %c0_i32_0 = arith.constant 0 : i32
    %c0_i32_1 = arith.constant 0 : i32
    return %c0_i32, %c0_i32_0 : i32, i32
  }
  func.func @transform_4(%arg0: i32) -> (i32, i32) {
    %c0_i32 = arith.constant 0 : i32
    %c0_i32_0 = arith.constant 0 : i32
    %c0_i32_1 = arith.constant 0 : i32
    return %c0_i32, %c0_i32_0 : i32, i32
  }
  func.func @transform_5(%arg0: i32) -> (i32, i32) {
    %c0_i32 = arith.constant 0 : i32
    %c0_i32_0 = arith.constant 0 : i32
    %c0_i32_1 = arith.constant 0 : i32
    return %c0_i32, %c0_i32_0 : i32, i32
  }
  func.func @transform_6(%arg0: i32) -> (i32, i32) {
    %c0_i32 = arith.constant 0 : i32
    %c0_i32_0 = arith.constant 0 : i32
    %c0_i32_1 = arith.constant 0 : i32
    return %c0_i32, %c0_i32_0 : i32, i32
  }
  func.func @transform_7(%arg0: i32) -> (i32, i32) {
    %c0_i32 = arith.constant 0 : i32
    %c0_i32_0 = arith.constant 0 : i32
    %c0_i32_1 = arith.constant 0 : i32
    return %c0_i32, %c0_i32_0 : i32, i32
  }
  func.func @transform_8(%arg0: i32) -> (i32, i32) {
    %c0_i32 = arith.constant 0 : i32
    %c0_i32_0 = arith.constant 0 : i32
    %c0_i32_1 = arith.constant 0 : i32
    return %c0_i32, %c0_i32_0 : i32, i32
  }
  func.func @transform_9(%arg0: i32) -> (i32, i32) {
    %c0_i32 = arith.constant 0 : i32
    %c0_i32_0 = arith.constant 0 : i32
    %c0_i32_1 = arith.constant 0 : i32
    return %c0_i32, %c0_i32_0 : i32, i32
  }
  func.func @transform_10(%arg0: i32) -> (i32, i32) {
    %c0_i32 = arith.constant 0 : i32
    %c0_i32_0 = arith.constant 0 : i32
    %c0_i32_1 = arith.constant 0 : i32
    return %c0_i32, %c0_i32_0 : i32, i32
  }
  func.func @transform_11(%arg0: i32) -> (i32, i32) {
    %c0_i32 = arith.constant 0 : i32
    %c0_i32_0 = arith.constant 0 : i32
    return %arg0, %c0_i32 : i32, i32
  }
}

</mosaic_0001>

<llo_original>
// kernel: tpu_custom_call.1
$region0: #{tpu_custom_call.1}
  #allocation0 [shape = 'u32[]', space=smem, size = 0x4, offset = 0x4, fixed_abs, tag = 'smem constant byte address 0x4 - core index']
  #allocation1 [shape = 'u32[144,128]{1,0:T(1,128)}', space=vmem, size = 0x12000, scoped, tag = 'internal scratch']
  #allocation2 [shape = 'f32[16,1536]{1,0:T(8,128)}', space=vmem, size = 0x18000, scoped, tag = 'scratch operand']
  #allocation3 [shape = 'f32[16,512]{1,0:T(8,128)}', space=vmem, size = 0x8000, scoped, tag = 'scratch operand']
  #allocation4 [shape = 'f32[1,1]{1,0:T(1,128)S(1)}', space=vmem, size = 0x200, scoped, tag = 'scoped memory for tpu_custom_call.1']
  %s0 = inlined_call_operand.vmem [shape: f32[16,32], index: 0, kind: input, shape index: {}]
  %s1 = inlined_call_operand.vmem [shape: f32[2,1,8], index: 1, kind: input, shape index: {}]
  %s2 = inlined_call_operand.vmem [shape: f32[16,1], index: 2, kind: input, shape index: {}]
  %s3 = inlined_call_operand.vmem [shape: bf16[32,1536], index: 3, kind: input, shape index: {}]
  %s4 = inlined_call_operand.vmem [shape: f32[1,1536], index: 4, kind: input, shape index: {}]
  %s5 = inlined_call_operand.vmem [shape: bf16[512,32], index: 5, kind: input, shape index: {}]
  %s6 = inlined_call_operand.vmem [shape: f32[1,32], index: 6, kind: input, shape index: {}]
  %s7 = inlined_call_operand.vmem [shape: f32[1,32], index: 7, kind: input, shape index: {}]
  %s8 = inlined_call_operand.<no memory space> [shape: f32[1,1], index: 8, kind: input, shape index: {}]
  %s9 = inlined_call_operand.vmem [shape: bf16[512,32], index: 9, kind: input, shape index: {}]
  %s10 = inlined_call_operand.vmem [shape: f32[1,32], index: 10, kind: input, shape index: {}]
  %s11 = inlined_call_operand.hbm [shape: f32[2,32], index: 11, kind: output, shape index: {}]
  %s12 = sld [smem:[#allocation0]]
  $region61: #{tpu_custom_call.1} parent=0
    _
  %s14 = ssub.s32 1, %s12
  %s15 = scalar_select 0, %s14, %s12
  %v16 = vstv %s8
  %17 = vst [vmem:[#allocation4] sm:$0x1] %v16
  $region1: #{tpu_custom_call.1} parent=0
    #allocation5 [shape = 'u8[1024]{0}', space=vmem, size = 0x400, scoped, tag = 'output window, operand 0, single buffered']
    #allocation6 [shape = 's32[1]{0}', space=sflag, size = 0x4, scoped, tag = 'scoped memory for tpu_custom_call.1']
    %18 = vsyncpa [#allocation6], 0
    // Predicated region
    $region2: #{tpu_custom_call.1} parent=1 // pred_check
      _
    $region3: #{tpu_custom_call.1} parent=1 // pred_check_branch
      %20 = sbr.rel (0) target = $region5
    $region4: #{tpu_custom_call.1} parent=1 // pred_region
      _
    $region5: #{tpu_custom_call.1} parent=1 // pred_fallthru
      _
    // Predicated region
    $region6: #{tpu_custom_call.1} parent=1 // pred_check
      _
    $region7: #{tpu_custom_call.1} parent=1 // pred_check_branch
      %22 = sbr.rel (0) target = $region9
    $region8: #{tpu_custom_call.1} parent=1 // pred_region
      _
    $region9: #{tpu_custom_call.1} parent=1 // pred_fallthru
      _
    // Predicated region
    $region10: #{tpu_custom_call.1} parent=1 // pred_check
      _
    $region11: #{tpu_custom_call.1} parent=1 // pred_check_branch
      %24 = sbr.rel (0) target = $region13
    $region12: #{tpu_custom_call.1} parent=1 // pred_region
      _
    $region13: #{tpu_custom_call.1} parent=1 // pred_fallthru
      _
    // Predicated region
    $region14: #{tpu_custom_call.1} parent=1 // pred_check
      _
    $region15: #{tpu_custom_call.1} parent=1 // pred_check_branch
      %26 = sbr.rel (0) target = $region17
    $region16: #{tpu_custom_call.1} parent=1 // pred_region
      _
    $region17: #{tpu_custom_call.1} parent=1 // pred_fallthru
      _
    // Predicated region
    $region18: #{tpu_custom_call.1} parent=1 // pred_check
      _
    $region19: #{tpu_custom_call.1} parent=1 // pred_check_branch
      %28 = sbr.rel (0) target = $region21
    $region20: #{tpu_custom_call.1} parent=1 // pred_region
      _
    $region21: #{tpu_custom_call.1} parent=1 // pred_fallthru
      _
    // Predicated region
    $region22: #{tpu_custom_call.1} parent=1 // pred_check
      _
    $region23: #{tpu_custom_call.1} parent=1 // pred_check_branch
      %30 = sbr.rel (0) target = $region25
    $region24: #{tpu_custom_call.1} parent=1 // pred_region
      _
    $region25: #{tpu_custom_call.1} parent=1 // pred_fallthru
      _
    // Predicated region
    $region26: #{tpu_custom_call.1} parent=1 // pred_check
      _
    $region27: #{tpu_custom_call.1} parent=1 // pred_check_branch
      %32 = sbr.rel (0) target = $region29
    $region28: #{tpu_custom_call.1} parent=1 // pred_region
      _
    $region29: #{tpu_custom_call.1} parent=1 // pred_fallthru
      _
    // Predicated region
    $region30: #{tpu_custom_call.1} parent=1 // pred_check
      _
    $region31: #{tpu_custom_call.1} parent=1 // pred_check_branch
      %34 = sbr.rel (0) target = $region33
    $region32: #{tpu_custom_call.1} parent=1 // pred_region
      _
    $region33: #{tpu_custom_call.1} parent=1 // pred_fallthru
      _
    // Predicated region
    $region34: #{tpu_custom_call.1} parent=1 // pred_check
      _
    $region35: #{tpu_custom_call.1} parent=1 // pred_check_branch
      %36 = sbr.rel (0) target = $region37
    $region36: #{tpu_custom_call.1} parent=1 // pred_region
      _
    $region37: #{tpu_custom_call.1} parent=1 // pred_fallthru
      _
    // Predicated region
    $region38: #{tpu_custom_call.1} parent=1 // pred_check
      _
    $region39: #{tpu_custom_call.1} parent=1 // pred_check_branch
      %38 = sbr.rel (0) target = $region41
    $region40: #{tpu_custom_call.1} parent=1 // pred_region
      _
    $region41: #{tpu_custom_call.1} parent=1 // pred_fallthru
      _
    // Predicated region
    $region42: #{tpu_custom_call.1} parent=1 // pred_check
      _
    $region43: #{tpu_custom_call.1} parent=1 // pred_check_branch
      %40 = sbr.rel (0) target = $region45
    $region44: #{tpu_custom_call.1} parent=1 // pred_region
      _
    $region45: #{tpu_custom_call.1} parent=1 // pred_fallthru
      _
    %v42 = vld [vmem:[%s0] sm:$0xff]
    %v43 = vld [vmem:[%s0 + $0x8] sm:$0xff]
    %v44 = vpack.c.bf16 %v43, %v42
    %v45 = vld [vmem:[%s3] sm:$0xff]
    %v46 = vld [vmem:[%s3 + $0x8] sm:$0xff]
    %v47 = vld [vmem:[%s3 + $0x10] sm:$0xff]
    %v48 = vld [vmem:[%s3 + $0x18] sm:$0xff]
    %v49 = vld [vmem:[%s3 + $0x20] sm:$0xff]
    %v50 = vld [vmem:[%s3 + $0x28] sm:$0xff]
    %v51 = vld [vmem:[%s3 + $0x30] sm:$0xff]
    %v52 = vld [vmem:[%s3 + $0x38] sm:$0xff]
    %v53 = vld [vmem:[%s3 + $0x40] sm:$0xff]
    %v54 = vld [vmem:[%s3 + $0x48] sm:$0xff]
    %v55 = vld [vmem:[%s3 + $0x50] sm:$0xff]
    %v56 = vld [vmem:[%s3 + $0x58] sm:$0xff]
    %v57 = vld [vmem:[%s3 + $0x60] sm:$0xff]
    %v58 = vld [vmem:[%s3 + $0x68] sm:$0xff]
    %v59 = vld [vmem:[%s3 + $0x70] sm:$0xff]
    %v60 = vld [vmem:[%s3 + $0x78] sm:$0xff]
    %v61 = vld [vmem:[%s3 + $0x80] sm:$0xff]
    %v62 = vld [vmem:[%s3 + $0x88] sm:$0xff]
    %v63 = vld [vmem:[%s3 + $0x90] sm:$0xff]
    %v64 = vld [vmem:[%s3 + $0x98] sm:$0xff]
    %v65 = vld [vmem:[%s3 + $0xa0] sm:$0xff]
    %v66 = vld [vmem:[%s3 + $0xa8] sm:$0xff]
    %v67 = vld [vmem:[%s3 + $0xb0] sm:$0xff]
    %v68 = vld [vmem:[%s3 + $0xb8] sm:$0xff]
    %v69 = vld [vmem:[%s4] sm:$0xff]
    %v70 = vld [vmem:[%s4 + $0x8] sm:$0xf]
    %v73 = vlaneseq
    %v74 = vshrl.u32 %v73, 7
    %v75 = vsub.s32 0, %v74
    %v76 = vrot.slane %v69, %v75
    %v77 = vlaneseq
    %v78 = vshrl.u32 %v77, 7
    %v79 = vsub.s32 1, %v78
    %v80 = vrot.slane %v69, %v79
    %v81 = vlaneseq
    %v82 = vshrl.u32 %v81, 7
    %v83 = vsub.s32 2, %v82
    %v84 = vrot.slane %v69, %v83
    %v85 = vlaneseq
    %v86 = vshrl.u32 %v85, 7
    %v87 = vsub.s32 3, %v86
    %v88 = vrot.slane %v69, %v87
    %v89 = vlaneseq
    %v90 = vshrl.u32 %v89, 7
    %v91 = vsub.s32 4, %v90
    %v92 = vrot.slane %v69, %v91
    %v93 = vlaneseq
    %v94 = vshrl.u32 %v93, 7
    %v95 = vsub.s32 5, %v94
    %v96 = vrot.slane %v69, %v95
    %v97 = vlaneseq
    %v98 = vshrl.u32 %v97, 7
    %v99 = vsub.s32 6, %v98
    %v100 = vrot.slane %v69, %v99
    %v101 = vlaneseq
    %v102 = vshrl.u32 %v101, 7
    %v103 = vsub.s32 7, %v102
    %v104 = vrot.slane %v69, %v103
    %v105 = vlaneseq
    %v106 = vshrl.u32 %v105, 7
    %v107 = vsub.s32 0, %v106
    %v108 = vrot.slane %v70, %v107
    %v109 = vlaneseq
    %v110 = vshrl.u32 %v109, 7
    %v111 = vsub.s32 1, %v110
    %v112 = vrot.slane %v70, %v111
    %v113 = vlaneseq
    %v114 = vshrl.u32 %v113, 7
    %v115 = vsub.s32 2, %v114
    %v116 = vrot.slane %v70, %v115
    %v117 = vlaneseq
    %v118 = vshrl.u32 %v117, 7
    %v119 = vsub.s32 3, %v118
    %v120 = vrot.slane %v70, %v119
    %v157 = vunpack.c.l.b16 %v45
    %v158 = vunpack.c.h.b16 %v45
    %v159 = vunpack.c.l.b16 %v46
    %v160 = vunpack.c.h.b16 %v46
    %v161 = vunpack.c.l.b16 %v47
    %v162 = vunpack.c.h.b16 %v47
    %v163 = vunpack.c.l.b16 %v48
    %v164 = vunpack.c.h.b16 %v48
    %v165 = vunpack.c.l.b16 %v49
    %v166 = vunpack.c.h.b16 %v49
    %v167 = vunpack.c.l.b16 %v50
    %v168 = vunpack.c.h.b16 %v50
    %v169 = vunpack.c.l.b16 %v51
    %v170 = vunpack.c.h.b16 %v51
    %v171 = vunpack.c.l.b16 %v52
    %v172 = vunpack.c.h.b16 %v52
    %v173 = vunpack.c.l.b16 %v53
    %v174 = vunpack.c.h.b16 %v53
    %v175 = vunpack.c.l.b16 %v54
    %v176 = vunpack.c.h.b16 %v54
    %v177 = vunpack.c.l.b16 %v55
    %v178 = vunpack.c.h.b16 %v55
    %v179 = vunpack.c.l.b16 %v56
    %v180 = vunpack.c.h.b16 %v56
    %v181 = vunpack.c.l.b16 %v57
    %v182 = vunpack.c.h.b16 %v57
    %v183 = vunpack.c.l.b16 %v58
    %v184 = vunpack.c.h.b16 %v58
    %v185 = vunpack.c.l.b16 %v59
    %v186 = vunpack.c.h.b16 %v59
    %v187 = vunpack.c.l.b16 %v60
    %v188 = vunpack.c.h.b16 %v60
    %v189 = vunpack.c.l.b16 %v61
    %v190 = vunpack.c.h.b16 %v61
    %v191 = vunpack.c.l.b16 %v62
    %v192 = vunpack.c.h.b16 %v62
    %v193 = vunpack.c.l.b16 %v63
    %v194 = vunpack.c.h.b16 %v63
    %v195 = vunpack.c.l.b16 %v64
    %v196 = vunpack.c.h.b16 %v64
    %v197 = vunpack.c.l.b16 %v65
    %v198 = vunpack.c.h.b16 %v65
    %v199 = vunpack.c.l.b16 %v66
    %v200 = vunpack.c.h.b16 %v66
    %v201 = vunpack.c.l.b16 %v67
    %v202 = vunpack.c.h.b16 %v67
    %v203 = vunpack.c.l.b16 %v68
    %v204 = vunpack.c.h.b16 %v68
    %v205 = vpack.c.b16 %v169, %v157
    %v206 = vpack.c.b16 %v170, %v158
    %v207 = vpack.c.b16 %v171, %v159
    %v208 = vpack.c.b16 %v172, %v160
    %v209 = vpack.c.b16 %v173, %v161
    %v210 = vpack.c.b16 %v174, %v162
    %v211 = vpack.c.b16 %v175, %v163
    %v212 = vpack.c.b16 %v176, %v164
    %v213 = vpack.c.b16 %v177, %v165
    %v214 = vpack.c.b16 %v178, %v166
    %v215 = vpack.c.b16 %v179, %v167
    %v216 = vpack.c.b16 %v180, %v168
    %v217 = vpack.c.b16 %v193, %v181
    %v218 = vpack.c.b16 %v194, %v182
    %v219 = vpack.c.b16 %v195, %v183
    %v220 = vpack.c.b16 %v196, %v184
    %v221 = vpack.c.b16 %v197, %v185
    %v222 = vpack.c.b16 %v198, %v186
    %v223 = vpack.c.b16 %v199, %v187
    %v224 = vpack.c.b16 %v200, %v188
    %v225 = vpack.c.b16 %v201, %v189
    %v226 = vpack.c.b16 %v202, %v190
    %v227 = vpack.c.b16 %v203, %v191
    %v228 = vpack.c.b16 %v204, %v192
    %vm253 = vcmask 261120
    %v255 = vsel %vm253, %v44, 0
    %257 = vmatprep.subr.bf16.mxu0 %v206
    %258 = vmatpush1.bf16.msra.mxu0 %v205
    %259 = vmatprep.subr.bf16.mxu0 %v218
    %260 = vmatpush1.bf16.msra.mxu0 %v217
    %261 = vmatprep.subr.bf16.mxu0 0
    %262 = vmatpush1.bf16.msra.mxu0 0
    %263 = vmatprep.subr.bf16.mxu0 0
    %264 = vmatpush1.bf16.msra.mxu0 0
    %265 = vmatprep.subr.bf16.mxu0 0
    %266 = vmatpush1.bf16.msra.mxu0 0
    %267 = vmatprep.subr.bf16.mxu0 0
    %268 = vmatpush1.bf16.msra.mxu0 0
    %269 = vmatprep.subr.bf16.mxu0 0
    %270 = vmatpush1.bf16.msra.mxu0 0
    %271 = vmatprep.subr.bf16.mxu0 0
    %272 = vmatpush1.bf16.msra.mxu0 0
    %273 = vmatprep.subr.bf16.mxu0 0
    %274 = vmatpush1.bf16.msra.mxu0 0
    %275 = vmatprep.subr.bf16.mxu0 0
    %276 = vmatpush1.bf16.msra.mxu0 0
    %277 = vmatprep.subr.bf16.mxu0 0
    %278 = vmatpush1.bf16.msra.mxu0 0
    %279 = vmatprep.subr.bf16.mxu0 0
    %280 = vmatpush1.bf16.msra.mxu0 0
    %281 = vmatprep.subr.bf16.mxu0 0
    %282 = vmatpush1.bf16.msra.mxu0 0
    %283 = vmatprep.subr.bf16.mxu0 0
    %284 = vmatpush1.bf16.msra.mxu0 0
    %285 = vmatprep.subr.bf16.mxu0 0
    %286 = vmatpush1.bf16.msra.mxu0 0
    %287 = vmatprep.subr.bf16.mxu0 0
    %288 = vmatpush1.bf16.msra.mxu0 0
    %289 = vmatprep.mubr.bf16.mxu0 0
    %290 = vmatmul.mubr.bf16.gmra.mrb[0].mxu0 %v255
    %v291 = vpop.f32.mrb[0].mxu0
    %v292 = vadd.f32 %v76, %v291
    %v293 = vpop.f32.mrb[0].mxu0
    %v294 = vadd.f32 %v80, %v293
    %v295 = vpop.f32.mrb[0].mxu0
    %v296 = vadd.f32 %v76, %v295
    %v297 = vpop.f32.mrb[0].mxu0
    %v298 = vadd.f32 %v80, %v297
    %299 = vdwg.mxu0
    %300 = vmatprep.subr.bf16.mxu0 %v208
    %301 = vmatpush1.bf16.msra.mxu0 %v207
    %302 = vmatprep.subr.bf16.mxu0 %v220
    %303 = vmatpush1.bf16.msra.mxu0 %v219
    %304 = vmatprep.subr.bf16.mxu0 0
    %305 = vmatpush1.bf16.msra.mxu0 0
    %306 = vmatprep.subr.bf16.mxu0 0
    %307 = vmatpush1.bf16.msra.mxu0 0
    %308 = vmatprep.subr.bf16.mxu0 0
    %309 = vmatpush1.bf16.msra.mxu0 0
    %310 = vmatprep.subr.bf16.mxu0 0
    %311 = vmatpush1.bf16.msra.mxu0 0
    %312 = vmatprep.subr.bf16.mxu0 0
    %313 = vmatpush1.bf16.msra.mxu0 0
    %314 = vmatprep.subr.bf16.mxu0 0
    %315 = vmatpush1.bf16.msra.mxu0 0
    %316 = vmatprep.subr.bf16.mxu0 0
    %317 = vmatpush1.bf16.msra.mxu0 0
    %318 = vmatprep.subr.bf16.mxu0 0
    %319 = vmatpush1.bf16.msra.mxu0 0
    %320 = vmatprep.subr.bf16.mxu0 0
    %321 = vmatpush1.bf16.msra.mxu0 0
    %322 = vmatprep.subr.bf16.mxu0 0
    %323 = vmatpush1.bf16.msra.mxu0 0
    %324 = vmatprep.subr.bf16.mxu0 0
    %325 = vmatpush1.bf16.msra.mxu0 0
    %326 = vmatprep.subr.bf16.mxu0 0
    %327 = vmatpush1.bf16.msra.mxu0 0
    %328 = vmatprep.subr.bf16.mxu0 0
    %329 = vmatpush1.bf16.msra.mxu0 0
    %330 = vmatprep.subr.bf16.mxu0 0
    %331 = vmatpush1.bf16.msra.mxu0 0
    %332 = vmatprep.mubr.bf16.mxu0 0
    %333 = vmatmul.mubr.bf16.gmra.mrb[0].mxu0 %v255
    %v334 = vpop.f32.mrb[0].mxu0
    %v335 = vadd.f32 %v84, %v334
    %v336 = vpop.f32.mrb[0].mxu0
    %v337 = vadd.f32 %v88, %v336
    %v338 = vpop.f32.mrb[0].mxu0
    %v339 = vadd.f32 %v84, %v338
    %v340 = vpop.f32.mrb[0].mxu0
    %v341 = vadd.f32 %v88, %v340
    %342 = vdwg.mxu0
    %343 = vmatprep.subr.bf16.mxu0 %v210
    %344 = vmatpush1.bf16.msra.mxu0 %v209
    %345 = vmatprep.subr.bf16.mxu0 %v222
    %346 = vmatpush1.bf16.msra.mxu0 %v221
    %347 = vmatprep.subr.bf16.mxu0 0
    %348 = vmatpush1.bf16.msra.mxu0 0
    %349 = vmatprep.subr.bf16.mxu0 0
    %350 = vmatpush1.bf16.msra.mxu0 0
    %351 = vmatprep.subr.bf16.mxu0 0
    %352 = vmatpush1.bf16.msra.mxu0 0
    %353 = vmatprep.subr.bf16.mxu0 0
    %354 = vmatpush1.bf16.msra.mxu0 0
    %355 = vmatprep.subr.bf16.mxu0 0
    %356 = vmatpush1.bf16.msra.mxu0 0
    %357 = vmatprep.subr.bf16.mxu0 0
    %358 = vmatpush1.bf16.msra.mxu0 0
    %359 = vmatprep.subr.bf16.mxu0 0
    %360 = vmatpush1.bf16.msra.mxu0 0
    %361 = vmatprep.subr.bf16.mxu0 0
    %362 = vmatpush1.bf16.msra.mxu0 0
    %363 = vmatprep.subr.bf16.mxu0 0
    %364 = vmatpush1.bf16.msra.mxu0 0
    %365 = vmatprep.subr.bf16.mxu0 0
    %366 = vmatpush1.bf16.msra.mxu0 0
    %367 = vmatprep.subr.bf16.mxu0 0
    %368 = vmatpush1.bf16.msra.mxu0 0
    %369 = vmatprep.subr.bf16.mxu0 0
    %370 = vmatpush1.bf16.msra.mxu0 0
    %371 = vmatprep.subr.bf16.mxu0 0
    %372 = vmatpush1.bf16.msra.mxu0 0
    %373 = vmatprep.subr.bf16.mxu0 0
    %374 = vmatpush1.bf16.msra.mxu0 0
    %375 = vmatprep.mubr.bf16.mxu0 0
    %376 = vmatmul.mubr.bf16.gmra.mrb[0].mxu0 %v255
    %v377 = vpop.f32.mrb[0].mxu0
    %v378 = vadd.f32 %v92, %v377
    %v379 = vpop.f32.mrb[0].mxu0
    %v380 = vadd.f32 %v96, %v379
    %v381 = vpop.f32.mrb[0].mxu0
    %v382 = vadd.f32 %v92, %v381
    %v383 = vpop.f32.mrb[0].mxu0
    %v384 = vadd.f32 %v96, %v383
    %385 = vdwg.mxu0
    %386 = vmatprep.subr.bf16.mxu0 %v212
    %387 = vmatpush1.bf16.msra.mxu0 %v211
    %388 = vmatprep.subr.bf16.mxu0 %v224
    %389 = vmatpush1.bf16.msra.mxu0 %v223
    %390 = vmatprep.subr.bf16.mxu0 0
    %391 = vmatpush1.bf16.msra.mxu0 0
    %392 = vmatprep.subr.bf16.mxu0 0
    %393 = vmatpush1.bf16.msra.mxu0 0
    %394 = vmatprep.subr.bf16.mxu0 0
    %395 = vmatpush1.bf16.msra.mxu0 0
    %396 = vmatprep.subr.bf16.mxu0 0
    %397 = vmatpush1.bf16.msra.mxu0 0
    %398 = vmatprep.subr.bf16.mxu0 0
    %399 = vmatpush1.bf16.msra.mxu0 0
    %400 = vmatprep.subr.bf16.mxu0 0
    %401 = vmatpush1.bf16.msra.mxu0 0
    %402 = vmatprep.subr.bf16.mxu0 0
    %403 = vmatpush1.bf16.msra.mxu0 0
    %404 = vmatprep.subr.bf16.mxu0 0
    %405 = vmatpush1.bf16.msra.mxu0 0
    %406 = vmatprep.subr.bf16.mxu0 0
    %407 = vmatpush1.bf16.msra.mxu0 0
    %408 = vmatprep.subr.bf16.mxu0 0
    %409 = vmatpush1.bf16.msra.mxu0 0
    %410 = vmatprep.subr.bf16.mxu0 0
    %411 = vmatpush1.bf16.msra.mxu0 0
    %412 = vmatprep.subr.bf16.mxu0 0
    %413 = vmatpush1.bf16.msra.mxu0 0
    %414 = vmatprep.subr.bf16.mxu0 0
    %415 = vmatpush1.bf16.msra.mxu0 0
    %416 = vmatprep.subr.bf16.mxu0 0
    %417 = vmatpush1.bf16.msra.mxu0 0
    %418 = vmatprep.mubr.bf16.mxu0 0
    %419 = vmatmul.mubr.bf16.gmra.mrb[0].mxu0 %v255
    %v420 = vpop.f32.mrb[0].mxu0
    %v421 = vadd.f32 %v100, %v420
    %v422 = vpop.f32.mrb[0].mxu0
    %v423 = vadd.f32 %v104, %v422
    %v424 = vpop.f32.mrb[0].mxu0
    %v425 = vadd.f32 %v100, %v424
    %v426 = vpop.f32.mrb[0].mxu0
    %v427 = vadd.f32 %v104, %v426
    %428 = vdwg.mxu0
    %429 = vmatprep.subr.bf16.mxu0 %v214
    %430 = vmatpush1.bf16.msra.mxu0 %v213
    %431 = vmatprep.subr.bf16.mxu0 %v226
    %432 = vmatpush1.bf16.msra.mxu0 %v225
    %433 = vmatprep.subr.bf16.mxu0 0
    %434 = vmatpush1.bf16.msra.mxu0 0
    %435 = vmatprep.subr.bf16.mxu0 0
    %436 = vmatpush1.bf16.msra.mxu0 0
    %437 = vmatprep.subr.bf16.mxu0 0
    %438 = vmatpush1.bf16.msra.mxu0 0
    %439 = vmatprep.subr.bf16.mxu0 0
    %440 = vmatpush1.bf16.msra.mxu0 0
    %441 = vmatprep.subr.bf16.mxu0 0
    %442 = vmatpush1.bf16.msra.mxu0 0
    %443 = vmatprep.subr.bf16.mxu0 0
    %444 = vmatpush1.bf16.msra.mxu0 0
    %445 = vmatprep.subr.bf16.mxu0 0
    %446 = vmatpush1.bf16.msra.mxu0 0
    %447 = vmatprep.subr.bf16.mxu0 0
    %448 = vmatpush1.bf16.msra.mxu0 0
    %449 = vmatprep.subr.bf16.mxu0 0
    %450 = vmatpush1.bf16.msra.mxu0 0
    %451 = vmatprep.subr.bf16.mxu0 0
    %452 = vmatpush1.bf16.msra.mxu0 0
    %453 = vmatprep.subr.bf16.mxu0 0
    %454 = vmatpush1.bf16.msra.mxu0 0
    %455 = vmatprep.subr.bf16.mxu0 0
    %456 = vmatpush1.bf16.msra.mxu0 0
    %457 = vmatprep.subr.bf16.mxu0 0
    %458 = vmatpush1.bf16.msra.mxu0 0
    %459 = vmatprep.subr.bf16.mxu0 0
    %460 = vmatpush1.bf16.msra.mxu0 0
    %461 = vmatprep.mubr.bf16.mxu0 0
    %462 = vmatmul.mubr.bf16.gmra.mrb[0].mxu0 %v255
    %v463 = vpop.f32.mrb[0].mxu0
    %v464 = vadd.f32 %v108, %v463
    %v465 = vpop.f32.mrb[0].mxu0
    %v466 = vadd.f32 %v112, %v465
    %v467 = vpop.f32.mrb[0].mxu0
    %v468 = vadd.f32 %v108, %v467
    %v469 = vpop.f32.mrb[0].mxu0
    %v470 = vadd.f32 %v112, %v469
    %471 = vdwg.mxu0
    %472 = vmatprep.subr.bf16.mxu0 %v216
    %473 = vmatpush1.bf16.msra.mxu0 %v215
    %474 = vmatprep.subr.bf16.mxu0 %v228
    %475 = vmatpush1.bf16.msra.mxu0 %v227
    %476 = vmatprep.subr.bf16.mxu0 0
    %477 = vmatpush1.bf16.msra.mxu0 0
    %478 = vmatprep.subr.bf16.mxu0 0
    %479 = vmatpush1.bf16.msra.mxu0 0
    %480 = vmatprep.subr.bf16.mxu0 0
    %481 = vmatpush1.bf16.msra.mxu0 0
    %482 = vmatprep.subr.bf16.mxu0 0
    %483 = vmatpush1.bf16.msra.mxu0 0
    %484 = vmatprep.subr.bf16.mxu0 0
    %485 = vmatpush1.bf16.msra.mxu0 0
    %486 = vmatprep.subr.bf16.mxu0 0
    %487 = vmatpush1.bf16.msra.mxu0 0
    %488 = vmatprep.subr.bf16.mxu0 0
    %489 = vmatpush1.bf16.msra.mxu0 0
    %490 = vmatprep.subr.bf16.mxu0 0
    %491 = vmatpush1.bf16.msra.mxu0 0
    %492 = vmatprep.subr.bf16.mxu0 0
    %493 = vmatpush1.bf16.msra.mxu0 0
    %494 = vmatprep.subr.bf16.mxu0 0
    %495 = vmatpush1.bf16.msra.mxu0 0
    %496 = vmatprep.subr.bf16.mxu0 0
    %497 = vmatpush1.bf16.msra.mxu0 0
    %498 = vmatprep.subr.bf16.mxu0 0
    %499 = vmatpush1.bf16.msra.mxu0 0
    %500 = vmatprep.subr.bf16.mxu0 0
    %501 = vmatpush1.bf16.msra.mxu0 0
    %502 = vmatprep.subr.bf16.mxu0 0
    %503 = vmatpush1.bf16.msra.mxu0 0
    %504 = vmatprep.mubr.bf16.mxu0 0
    %505 = vmatmul.mubr.bf16.gmra.mrb[0].mxu0 %v255
    %v506 = vpop.f32.mrb[0].mxu0
    %v507 = vadd.f32 %v116, %v506
    %v508 = vpop.f32.mrb[0].mxu0
    %v509 = vadd.f32 %v120, %v508
    %v510 = vpop.f32.mrb[0].mxu0
    %v511 = vadd.f32 %v116, %v510
    %v512 = vpop.f32.mrb[0].mxu0
    %v513 = vadd.f32 %v120, %v512
    %514 = vdwg.mxu0
    %515 = vst [vmem:[#allocation2] sm:$0xff] %v292
    %516 = vst [vmem:[#allocation2 + $0x8] sm:$0xff] %v294
    %517 = vst [vmem:[#allocation2 + $0x10] sm:$0xff] %v335
    %518 = vst [vmem:[#allocation2 + $0x18] sm:$0xff] %v337
    %519 = vst [vmem:[#allocation2 + $0x20] sm:$0xff] %v378
    %520 = vst [vmem:[#allocation2 + $0x28] sm:$0xff] %v380
    %521 = vst [vmem:[#allocation2 + $0x30] sm:$0xff] %v421
    %522 = vst [vmem:[#allocation2 + $0x38] sm:$0xff] %v423
    %523 = vst [vmem:[#allocation2 + $0x40] sm:$0xff] %v464
    %524 = vst [vmem:[#allocation2 + $0x48] sm:$0xff] %v466
    %525 = vst [vmem:[#allocation2 + $0x50] sm:$0xff] %v507
    %526 = vst [vmem:[#allocation2 + $0x58] sm:$0xff] %v509
    %527 = vst [vmem:[#allocation2 + $0x60] sm:$0xff] %v296
    %528 = vst [vmem:[#allocation2 + $0x68] sm:$0xff] %v298
    %529 = vst [vmem:[#allocation2 + $0x70] sm:$0xff] %v339
    %530 = vst [vmem:[#allocation2 + $0x78] sm:$0xff] %v341
    %531 = vst [vmem:[#allocation2 + $0x80] sm:$0xff] %v382
    %532 = vst [vmem:[#allocation2 + $0x88] sm:$0xff] %v384
    %533 = vst [vmem:[#allocation2 + $0x90] sm:$0xff] %v425
    %534 = vst [vmem:[#allocation2 + $0x98] sm:$0xff] %v427
    %535 = vst [vmem:[#allocation2 + $0xa0] sm:$0xff] %v468
    %536 = vst [vmem:[#allocation2 + $0xa8] sm:$0xff] %v470
    %537 = vst [vmem:[#allocation2 + $0xb0] sm:$0xff] %v511
    %538 = vst [vmem:[#allocation2 + $0xb8] sm:$0xff] %v513
    loop: start=0, step=1, limit=2
    $region46: #{tpu_custom_call.1} parent=1 // loop_pre_header
      _
    $region47: #{tpu_custom_call.1} parent=1 // loop_header
      %s540 = sphi 0, %s544
      %p541 = scmp.ge.s32.totalorder %s540, 2
    $region48: #{tpu_custom_call.1} parent=1 // loop_header_branch
      %543 = sbr.rel (%p541) target = $region52
    $region49: #{tpu_custom_call.1} parent=1 // loop_body
      %s545 = smul.u32 %s540, 8
      %s546 = scalar_lea.vmem %s1, %s540
      %v547 = vld [vmem:[%s546] sm:$0x1]
      %s548 = sshra.s32 %s545, 3
      %s549 = sand.u32 %s545, 7
      %s550 = smul.u32 %s548, 12
      %s551 = smul.addr %s550, 8
      %s552 = scalar_lea.vmem [#allocation2], %s551
      %v553 = vld [vmem:[%s552] sm:$0xff]
      %v554 = vpack.c.bf16 %v553, %v553
      %v555 = vld [vmem:[%s552 + $0x20] sm:$0xff]
      %v556 = vpack.c.bf16 %v555, %v555
      %v557 = vld [vmem:[%s552 + $0x40] sm:$0xff]
      %v558 = vpack.c.bf16 %v557, %v557
      %559 = vmatprep.subr.bf16.mxu0 0
      %560 = vmatpush1.bf16.xpose.msra.mxu0 %v556
      %561 = vmatprep.subr.bf16.mxu0 0
      %562 = vmatpush1.bf16.xpose.msra.mxu0 0
      %563 = vmatprep.subr.bf16.mxu0 0
      %564 = vmatpush1.bf16.xpose.msra.mxu0 0
      %565 = vmatprep.subr.bf16.mxu0 0
      %566 = vmatpush1.bf16.xpose.msra.mxu0 0
      %567 = vmatprep.subr.bf16.mxu0 0
      %568 = vmatpush1.bf16.xpose.msra.mxu0 0
      %569 = vmatprep.subr.bf16.mxu0 0
      %570 = vmatpush1.bf16.xpose.msra.mxu0 0
      %571 = vmatprep.subr.bf16.mxu0 0
      %572 = vmatpush1.bf16.xpose.msra.mxu0 0
      %573 = vmatprep.subr.bf16.mxu0 0
      %574 = vmatpush1.bf16.xpose.msra.mxu0 0
      %575 = vmatprep.subr.bf16.mxu0 0
      %576 = vmatpush1.bf16.xpose.msra.mxu0 0
      %577 = vmatprep.subr.bf16.mxu0 0
      %578 = vmatpush1.bf16.xpose.msra.mxu0 0
      %579 = vmatprep.subr.bf16.mxu0 0
      %580 = vmatpush1.bf16.xpose.msra.mxu0 0
      %581 = vmatprep.subr.bf16.mxu0 0
      %582 = vmatpush1.bf16.xpose.msra.mxu0 0
      %583 = vmatprep.subr.bf16.mxu0 0
      %584 = vmatpush1.bf16.xpose.msra.mxu0 0
      %585 = vmatprep.subr.bf16.mxu0 0
      %586 = vmatpush1.bf16.xpose.msra.mxu0 0
      %587 = vmatprep.subr.bf16.mxu0 0
      %588 = vmatpush1.bf16.xpose.msra.mxu0 0
      %589 = vmatprep.subr.bf16.mxu0 0
      %590 = vmatpush1.bf16.xpose.msra.mxu0 0
      %591 = vmatprep.mubr.bf16.mxu0 0
      %592 = vmatmul.mubr.bf16.gmra.mrb[0].mxu0 %v554
      %v593 = vpop.f32.mrb[0].mxu0
      %v594 = vadd.f32 0.0, %v593
      %v595 = vpop.f32.mrb[0].mxu0
      %v596 = vpop.f32.mrb[0].mxu0
      %v597 = vpop.f32.mrb[0].mxu0
      %598 = vdwg.mxu0
      %v599 = vmul.f32 %v594, 1.442695
      %v600 = vpow.pop %v599
      %v602 = vlaneseq
      %v603 = vshrl.u32 %v602, 7
      %v604 = vsub.s32 0, %v603
      %v605 = vrot.slane %v547, %v604
      %v607 = vmul.f32 %v600, %v605
      %vm608 = vcmask 64512
      %v609 = vsel %vm608, %v607, 0.0
      %610 = vadd.xlane.f32.xlu0 %v609
      %v611 = vpop.xlane.xlu0 %610
      %v612 = vadd.f32 %v611, 1e-08
      %v613 = vrcp.pop %v612
      %v614 = vmul.f32 %v607, %v613
      %v615 = vpack.c.bf16 %v614, %v614
      %v617 = vsel %vm608, %v615, 0
      %vm619 = vcmask 1043456
      %v621 = vsel %vm619, %v558, 0
      %623 = vmatprep.subr.bf16.mxu0 0
      %624 = vmatpush1.bf16.msra.mxu0 %v621
      %625 = vmatprep.subr.bf16.mxu0 0
      %626 = vmatpush1.bf16.msra.mxu0 0
      %627 = vmatprep.subr.bf16.mxu0 0
      %628 = vmatpush1.bf16.msra.mxu0 0
      %629 = vmatprep.subr.bf16.mxu0 0
      %630 = vmatpush1.bf16.msra.mxu0 0
      %631 = vmatprep.subr.bf16.mxu0 0
      %632 = vmatpush1.bf16.msra.mxu0 0
      %633 = vmatprep.subr.bf16.mxu0 0
      %634 = vmatpush1.bf16.msra.mxu0 0
      %635 = vmatprep.subr.bf16.mxu0 0
      %636 = vmatpush1.bf16.msra.mxu0 0
      %637 = vmatprep.subr.bf16.mxu0 0
      %638 = vmatpush1.bf16.msra.mxu0 0
      %639 = vmatprep.subr.bf16.mxu0 0
      %640 = vmatpush1.bf16.msra.mxu0 0
      %641 = vmatprep.subr.bf16.mxu0 0
      %642 = vmatpush1.bf16.msra.mxu0 0
      %643 = vmatprep.subr.bf16.mxu0 0
      %644 = vmatpush1.bf16.msra.mxu0 0
      %645 = vmatprep.subr.bf16.mxu0 0
      %646 = vmatpush1.bf16.msra.mxu0 0
      %647 = vmatprep.subr.bf16.mxu0 0
      %648 = vmatpush1.bf16.msra.mxu0 0
      %649 = vmatprep.subr.bf16.mxu0 0
      %650 = vmatpush1.bf16.msra.mxu0 0
      %651 = vmatprep.subr.bf16.mxu0 0
      %652 = vmatpush1.bf16.msra.mxu0 0
      %653 = vmatprep.subr.bf16.mxu0 0
      %654 = vmatpush1.bf16.msra.mxu0 0
      %655 = vmatprep.mubr.bf16.mxu0 0
      %656 = vmatmul.mubr.bf16.gmra.mrb[0].mxu0 %v617
      %v657 = vpop.f32.mrb[0].mxu0
      %v658 = vadd.f32 0.0, %v657
      %v659 = vpop.f32.mrb[0].mxu0
      %v660 = vpop.f32.mrb[0].mxu0
      %v661 = vpop.f32.mrb[0].mxu0
      %662 = vdwg.mxu0
      %s663 = smul.u32 %s548, 4
      %s664 = smul.addr %s663, 8
      %s665 = scalar_lea.vmem [#allocation3], %s664
      %666 = vst [vmem:[%s665] sm:$0xff] %v658
      %v667 = vld [vmem:[%s552 + $0x8] sm:$0xff]
      %v668 = vpack.c.bf16 %v667, %v667
      %v669 = vld [vmem:[%s552 + $0x28] sm:$0xff]
      %v670 = vpack.c.bf16 %v669, %v669
      %v671 = vld [vmem:[%s552 + $0x48] sm:$0xff]
      %v672 = vpack.c.bf16 %v671, %v671
      %673 = vmatprep.subr.bf16.mxu0 0
      %674 = vmatpush1.bf16.xpose.msra.mxu0 %v670
      %675 = vmatprep.subr.bf16.mxu0 0
      %676 = vmatpush1.bf16.xpose.msra.mxu0 0
      %677 = vmatprep.subr.bf16.mxu0 0
      %678 = vmatpush1.bf16.xpose.msra.mxu0 0
      %679 = vmatprep.subr.bf16.mxu0 0
      %680 = vmatpush1.bf16.xpose.msra.mxu0 0
      %681 = vmatprep.subr.bf16.mxu0 0
      %682 = vmatpush1.bf16.xpose.msra.mxu0 0
      %683 = vmatprep.subr.bf16.mxu0 0
      %684 = vmatpush1.bf16.xpose.msra.mxu0 0
      %685 = vmatprep.subr.bf16.mxu0 0
      %686 = vmatpush1.bf16.xpose.msra.mxu0 0
      %687 = vmatprep.subr.bf16.mxu0 0
      %688 = vmatpush1.bf16.xpose.msra.mxu0 0
      %689 = vmatprep.subr.bf16.mxu0 0
      %690 = vmatpush1.bf16.xpose.msra.mxu0 0
      %691 = vmatprep.subr.bf16.mxu0 0
      %692 = vmatpush1.bf16.xpose.msra.mxu0 0
      %693 = vmatprep.subr.bf16.mxu0 0
      %694 = vmatpush1.bf16.xpose.msra.mxu0 0
      %695 = vmatprep.subr.bf16.mxu0 0
      %696 = vmatpush1.bf16.xpose.msra.mxu0 0
      %697 = vmatprep.subr.bf16.mxu0 0
      %698 = vmatpush1.bf16.xpose.msra.mxu0 0
      %699 = vmatprep.subr.bf16.mxu0 0
      %700 = vmatpush1.bf16.xpose.msra.mxu0 0
      %701 = vmatprep.subr.bf16.mxu0 0
      %702 = vmatpush1.bf16.xpose.msra.mxu0 0
      %703 = vmatprep.subr.bf16.mxu0 0
      %704 = vmatpush1.bf16.xpose.msra.mxu0 0
      %705 = vmatprep.mubr.bf16.mxu0 0
      %706 = vmatmul.mubr.bf16.gmra.mrb[0].mxu0 %v668
      %v707 = vpop.f32.mrb[0].mxu0
      %v708 = vadd.f32 0.0, %v707
      %v709 = vpop.f32.mrb[0].mxu0
      %v710 = vpop.f32.mrb[0].mxu0
      %v711 = vpop.f32.mrb[0].mxu0
      %712 = vdwg.mxu0
      %v713 = vmul.f32 %v708, 1.442695
      %v714 = vpow.pop %v713
      %v715 = vmul.f32 %v714, %v605
      %v716 = vsel %vm608, %v715, 0.0
      %717 = vadd.xlane.f32.xlu0 %v716
      %v718 = vpop.xlane.xlu0 %717
      %v719 = vadd.f32 %v718, 1e-08
      %v720 = vrcp.pop %v719
      %v721 = vmul.f32 %v715, %v720
      %v722 = vpack.c.bf16 %v721, %v721
      %v724 = vsel %vm608, %v722, 0
      %v727 = vsel %vm619, %v672, 0
      %729 = vmatprep.subr.bf16.mxu0 0
      %730 = vmatpush1.bf16.msra.mxu0 %v727
      %731 = vmatprep.subr.bf16.mxu0 0
      %732 = vmatpush1.bf16.msra.mxu0 0
      %733 = vmatprep.subr.bf16.mxu0 0
      %734 = vmatpush1.bf16.msra.mxu0 0
      %735 = vmatprep.subr.bf16.mxu0 0
      %736 = vmatpush1.bf16.msra.mxu0 0
      %737 = vmatprep.subr.bf16.mxu0 0
      %738 = vmatpush1.bf16.msra.mxu0 0
      %739 = vmatprep.subr.bf16.mxu0 0
      %740 = vmatpush1.bf16.msra.mxu0 0
      %741 = vmatprep.subr.bf16.mxu0 0
      %742 = vmatpush1.bf16.msra.mxu0 0
      %743 = vmatprep.subr.bf16.mxu0 0
      %744 = vmatpush1.bf16.msra.mxu0 0
      %745 = vmatprep.subr.bf16.mxu0 0
      %746 = vmatpush1.bf16.msra.mxu0 0
      %747 = vmatprep.subr.bf16.mxu0 0
      %748 = vmatpush1.bf16.msra.mxu0 0
      %749 = vmatprep.subr.bf16.mxu0 0
      %750 = vmatpush1.bf16.msra.mxu0 0
      %751 = vmatprep.subr.bf16.mxu0 0
      %752 = vmatpush1.bf16.msra.mxu0 0
      %753 = vmatprep.subr.bf16.mxu0 0
      %754 = vmatpush1.bf16.msra.mxu0 0
      %755 = vmatprep.subr.bf16.mxu0 0
      %756 = vmatpush1.bf16.msra.mxu0 0
      %757 = vmatprep.subr.bf16.mxu0 0
      %758 = vmatpush1.bf16.msra.mxu0 0
      %759 = vmatprep.subr.bf16.mxu0 0
      %760 = vmatpush1.bf16.msra.mxu0 0
      %761 = vmatprep.mubr.bf16.mxu0 0
      %762 = vmatmul.mubr.bf16.gmra.mrb[0].mxu0 %v724
      %v763 = vpop.f32.mrb[0].mxu0
      %v764 = vadd.f32 0.0, %v763
      %v765 = vpop.f32.mrb[0].mxu0
      %v766 = vpop.f32.mrb[0].mxu0
      %v767 = vpop.f32.mrb[0].mxu0
      %768 = vdwg.mxu0
      %769 = vst [vmem:[%s665 + $0x8] sm:$0xff] %v764
      %v770 = vld [vmem:[%s552 + $0x10] sm:$0xff]
      %v771 = vpack.c.bf16 %v770, %v770
      %v772 = vld [vmem:[%s552 + $0x30] sm:$0xff]
      %v773 = vpack.c.bf16 %v772, %v772
      %v774 = vld [vmem:[%s552 + $0x50] sm:$0xff]
      %v775 = vpack.c.bf16 %v774, %v774
      %776 = vmatprep.subr.bf16.mxu0 0
      %777 = vmatpush1.bf16.xpose.msra.mxu0 %v773
      %778 = vmatprep.subr.bf16.mxu0 0
      %779 = vmatpush1.bf16.xpose.msra.mxu0 0
      %780 = vmatprep.subr.bf16.mxu0 0
      %781 = vmatpush1.bf16.xpose.msra.mxu0 0
      %782 = vmatprep.subr.bf16.mxu0 0
      %783 = vmatpush1.bf16.xpose.msra.mxu0 0
      %784 = vmatprep.subr.bf16.mxu0 0
      %785 = vmatpush1.bf16.xpose.msra.mxu0 0
      %786 = vmatprep.subr.bf16.mxu0 0
      %787 = vmatpush1.bf16.xpose.msra.mxu0 0
      %788 = vmatprep.subr.bf16.mxu0 0
      %789 = vmatpush1.bf16.xpose.msra.mxu0 0
      %790 = vmatprep.subr.bf16.mxu0 0
      %791 = vmatpush1.bf16.xpose.msra.mxu0 0
      %792 = vmatprep.subr.bf16.mxu0 0
      %793 = vmatpush1.bf16.xpose.msra.mxu0 0
      %794 = vmatprep.subr.bf16.mxu0 0
      %795 = vmatpush1.bf16.xpose.msra.mxu0 0
      %796 = vmatprep.subr.bf16.mxu0 0
      %797 = vmatpush1.bf16.xpose.msra.mxu0 0
      %798 = vmatprep.subr.bf16.mxu0 0
      %799 = vmatpush1.bf16.xpose.msra.mxu0 0
      %800 = vmatprep.subr.bf16.mxu0 0
      %801 = vmatpush1.bf16.xpose.msra.mxu0 0
      %802 = vmatprep.subr.bf16.mxu0 0
      %803 = vmatpush1.bf16.xpose.msra.mxu0 0
      %804 = vmatprep.subr.bf16.mxu0 0
      %805 = vmatpush1.bf16.xpose.msra.mxu0 0
      %806 = vmatprep.subr.bf16.mxu0 0
      %807 = vmatpush1.bf16.xpose.msra.mxu0 0
      %808 = vmatprep.mubr.bf16.mxu0 0
      %809 = vmatmul.mubr.bf16.gmra.mrb[0].mxu0 %v771
      %v810 = vpop.f32.mrb[0].mxu0
      %v811 = vadd.f32 0.0, %v810
      %v812 = vpop.f32.mrb[0].mxu0
      %v813 = vpop.f32.mrb[0].mxu0
      %v814 = vpop.f32.mrb[0].mxu0
      %815 = vdwg.mxu0
      %v816 = vmul.f32 %v811, 1.442695
      %v817 = vpow.pop %v816
      %v818 = vmul.f32 %v817, %v605
      %v819 = vsel %vm608, %v818, 0.0
      %820 = vadd.xlane.f32.xlu0 %v819
      %v821 = vpop.xlane.xlu0 %820
      %v822 = vadd.f32 %v821, 1e-08
      %v823 = vrcp.pop %v822
      %v824 = vmul.f32 %v818, %v823
      %v825 = vpack.c.bf16 %v824, %v824
      %v827 = vsel %vm608, %v825, 0
      %v830 = vsel %vm619, %v775, 0
      %832 = vmatprep.subr.bf16.mxu0 0
      %833 = vmatpush1.bf16.msra.mxu0 %v830
      %834 = vmatprep.subr.bf16.mxu0 0
      %835 = vmatpush1.bf16.msra.mxu0 0
      %836 = vmatprep.subr.bf16.mxu0 0
      %837 = vmatpush1.bf16.msra.mxu0 0
      %838 = vmatprep.subr.bf16.mxu0 0
      %839 = vmatpush1.bf16.msra.mxu0 0
      %840 = vmatprep.subr.bf16.mxu0 0
      %841 = vmatpush1.bf16.msra.mxu0 0
      %842 = vmatprep.subr.bf16.mxu0 0
      %843 = vmatpush1.bf16.msra.mxu0 0
      %844 = vmatprep.subr.bf16.mxu0 0
      %845 = vmatpush1.bf16.msra.mxu0 0
      %846 = vmatprep.subr.bf16.mxu0 0
      %847 = vmatpush1.bf16.msra.mxu0 0
      %848 = vmatprep.subr.bf16.mxu0 0
      %849 = vmatpush1.bf16.msra.mxu0 0
      %850 = vmatprep.subr.bf16.mxu0 0
      %851 = vmatpush1.bf16.msra.mxu0 0
      %852 = vmatprep.subr.bf16.mxu0 0
      %853 = vmatpush1.bf16.msra.mxu0 0
      %854 = vmatprep.subr.bf16.mxu0 0
      %855 = vmatpush1.bf16.msra.mxu0 0
      %856 = vmatprep.subr.bf16.mxu0 0
      %857 = vmatpush1.bf16.msra.mxu0 0
      %858 = vmatprep.subr.bf16.mxu0 0
      %859 = vmatpush1.bf16.msra.mxu0 0
      %860 = vmatprep.subr.bf16.mxu0 0
      %861 = vmatpush1.bf16.msra.mxu0 0
      %862 = vmatprep.subr.bf16.mxu0 0
      %863 = vmatpush1.bf16.msra.mxu0 0
      %864 = vmatprep.mubr.bf16.mxu0 0
      %865 = vmatmul.mubr.bf16.gmra.mrb[0].mxu0 %v827
      %v866 = vpop.f32.mrb[0].mxu0
      %v867 = vadd.f32 0.0, %v866
      %v868 = vpop.f32.mrb[0].mxu0
      %v869 = vpop.f32.mrb[0].mxu0
      %v870 = vpop.f32.mrb[0].mxu0
      %871 = vdwg.mxu0
      %872 = vst [vmem:[%s665 + $0x10] sm:$0xff] %v867
      %v873 = vld [vmem:[%s552 + $0x18] sm:$0xff]
      %v874 = vpack.c.bf16 %v873, %v873
      %v875 = vld [vmem:[%s552 + $0x38] sm:$0xff]
      %v876 = vpack.c.bf16 %v875, %v875
      %v877 = vld [vmem:[%s552 + $0x58] sm:$0xff]
      %v878 = vpack.c.bf16 %v877, %v877
      %879 = vmatprep.subr.bf16.mxu0 0
      %880 = vmatpush1.bf16.xpose.msra.mxu0 %v876
      %881 = vmatprep.subr.bf16.mxu0 0
      %882 = vmatpush1.bf16.xpose.msra.mxu0 0
      %883 = vmatprep.subr.bf16.mxu0 0
      %884 = vmatpush1.bf16.xpose.msra.mxu0 0
      %885 = vmatprep.subr.bf16.mxu0 0
      %886 = vmatpush1.bf16.xpose.msra.mxu0 0
      %887 = vmatprep.subr.bf16.mxu0 0
      %888 = vmatpush1.bf16.xpose.msra.mxu0 0
      %889 = vmatprep.subr.bf16.mxu0 0
      %890 = vmatpush1.bf16.xpose.msra.mxu0 0
      %891 = vmatprep.subr.bf16.mxu0 0
      %892 = vmatpush1.bf16.xpose.msra.mxu0 0
      %893 = vmatprep.subr.bf16.mxu0 0
      %894 = vmatpush1.bf16.xpose.msra.mxu0 0
      %895 = vmatprep.subr.bf16.mxu0 0
      %896 = vmatpush1.bf16.xpose.msra.mxu0 0
      %897 = vmatprep.subr.bf16.mxu0 0
      %898 = vmatpush1.bf16.xpose.msra.mxu0 0
      %899 = vmatprep.subr.bf16.mxu0 0
      %900 = vmatpush1.bf16.xpose.msra.mxu0 0
      %901 = vmatprep.subr.bf16.mxu0 0
      %902 = vmatpush1.bf16.xpose.msra.mxu0 0
      %903 = vmatprep.subr.bf16.mxu0 0
      %904 = vmatpush1.bf16.xpose.msra.mxu0 0
      %905 = vmatprep.subr.bf16.mxu0 0
      %906 = vmatpush1.bf16.xpose.msra.mxu0 0
      %907 = vmatprep.subr.bf16.mxu0 0
      %908 = vmatpush1.bf16.xpose.msra.mxu0 0
      %909 = vmatprep.subr.bf16.mxu0 0
      %910 = vmatpush1.bf16.xpose.msra.mxu0 0
      %911 = vmatprep.mubr.bf16.mxu0 0
      %912 = vmatmul.mubr.bf16.gmra.mrb[0].mxu0 %v874
      %v913 = vpop.f32.mrb[0].mxu0
      %v914 = vadd.f32 0.0, %v913
      %v915 = vpop.f32.mrb[0].mxu0
      %v916 = vpop.f32.mrb[0].mxu0
      %v917 = vpop.f32.mrb[0].mxu0
      %918 = vdwg.mxu0
      %v919 = vmul.f32 %v914, 1.442695
      %v920 = vpow.pop %v919
      %v921 = vmul.f32 %v920, %v605
      %v922 = vsel %vm608, %v921, 0.0
      %923 = vadd.xlane.f32.xlu0 %v922
      %v924 = vpop.xlane.xlu0 %923
      %v925 = vadd.f32 %v924, 1e-08
      %v926 = vrcp.pop %v925
      %v927 = vmul.f32 %v921, %v926
      %v928 = vpack.c.bf16 %v927, %v927
      %v930 = vsel %vm608, %v928, 0
      %v933 = vsel %vm619, %v878, 0
      %935 = vmatprep.subr.bf16.mxu0 0
      %936 = vmatpush1.bf16.msra.mxu0 %v933
      %937 = vmatprep.subr.bf16.mxu0 0
      %938 = vmatpush1.bf16.msra.mxu0 0
      %939 = vmatprep.subr.bf16.mxu0 0
      %940 = vmatpush1.bf16.msra.mxu0 0
      %941 = vmatprep.subr.bf16.mxu0 0
      %942 = vmatpush1.bf16.msra.mxu0 0
      %943 = vmatprep.subr.bf16.mxu0 0
      %944 = vmatpush1.bf16.msra.mxu0 0
      %945 = vmatprep.subr.bf16.mxu0 0
      %946 = vmatpush1.bf16.msra.mxu0 0
      %947 = vmatprep.subr.bf16.mxu0 0
      %948 = vmatpush1.bf16.msra.mxu0 0
      %949 = vmatprep.subr.bf16.mxu0 0
      %950 = vmatpush1.bf16.msra.mxu0 0
      %951 = vmatprep.subr.bf16.mxu0 0
      %952 = vmatpush1.bf16.msra.mxu0 0
      %953 = vmatprep.subr.bf16.mxu0 0
      %954 = vmatpush1.bf16.msra.mxu0 0
      %955 = vmatprep.subr.bf16.mxu0 0
      %956 = vmatpush1.bf16.msra.mxu0 0
      %957 = vmatprep.subr.bf16.mxu0 0
      %958 = vmatpush1.bf16.msra.mxu0 0
      %959 = vmatprep.subr.bf16.mxu0 0
      %960 = vmatpush1.bf16.msra.mxu0 0
      %961 = vmatprep.subr.bf16.mxu0 0
      %962 = vmatpush1.bf16.msra.mxu0 0
      %963 = vmatprep.subr.bf16.mxu0 0
      %964 = vmatpush1.bf16.msra.mxu0 0
      %965 = vmatprep.subr.bf16.mxu0 0
      %966 = vmatpush1.bf16.msra.mxu0 0
      %967 = vmatprep.mubr.bf16.mxu0 0
      %968 = vmatmul.mubr.bf16.gmra.mrb[0].mxu0 %v930
      %v969 = vpop.f32.mrb[0].mxu0
      %v970 = vadd.f32 0.0, %v969
      %v971 = vpop.f32.mrb[0].mxu0
      %v972 = vpop.f32.mrb[0].mxu0
      %v973 = vpop.f32.mrb[0].mxu0
      %974 = vdwg.mxu0
      %975 = vst [vmem:[%s665 + $0x18] sm:$0xff] %v970
    $region50: #{tpu_custom_call.1} parent=1 // loop_footer
      %s544 = sadd.s32 1, %s540
    $region51: #{tpu_custom_call.1} parent=1 // loop_footer_branch
      %539 = sbr.rel target = $region47
    $region52: #{tpu_custom_call.1} parent=1 // loop_exit
      _
    %v976 = vld [vmem:[#allocation3] sm:$0xff]
    %v977 = vld [vmem:[#allocation3 + $0x8] sm:$0xff]
    %v978 = vld [vmem:[#allocation3 + $0x10] sm:$0xff]
    %v979 = vld [vmem:[#allocation3 + $0x18] sm:$0xff]
    %v980 = vld [vmem:[#allocation3 + $0x20] sm:$0xff]
    %v981 = vld [vmem:[#allocation3 + $0x28] sm:$0xff]
    %v982 = vld [vmem:[#allocation3 + $0x30] sm:$0xff]
    %v983 = vld [vmem:[#allocation3 + $0x38] sm:$0xff]
    %v984 = vpack.c.bf16 %v980, %v976
    %v985 = vpack.c.bf16 %v981, %v977
    %v986 = vpack.c.bf16 %v982, %v978
    %v987 = vpack.c.bf16 %v983, %v979
    %v988 = vld [vmem:[%s5] sm:$0xf]
    %v989 = vld [vmem:[%s5 + $0x4] sm:$0xf]
    %v990 = vld [vmem:[%s5 + $0x8] sm:$0xf]
    %v991 = vld [vmem:[%s5 + $0xc] sm:$0xf]
    %v992 = vld [vmem:[%s5 + $0x10] sm:$0xf]
    %v993 = vld [vmem:[%s5 + $0x14] sm:$0xf]
    %v994 = vld [vmem:[%s5 + $0x18] sm:$0xf]
    %v995 = vld [vmem:[%s5 + $0x1c] sm:$0xf]
    %v996 = vld [vmem:[%s5 + $0x20] sm:$0xf]
    %v997 = vld [vmem:[%s5 + $0x24] sm:$0xf]
    %v998 = vld [vmem:[%s5 + $0x28] sm:$0xf]
    %v999 = vld [vmem:[%s5 + $0x2c] sm:$0xf]
    %v1000 = vld [vmem:[%s5 + $0x30] sm:$0xf]
    %v1001 = vld [vmem:[%s5 + $0x34] sm:$0xf]
    %v1002 = vld [vmem:[%s5 + $0x38] sm:$0xf]
    %v1003 = vld [vmem:[%s5 + $0x3c] sm:$0xf]
    %v1004 = vld [vmem:[%s5 + $0x40] sm:$0xf]
    %v1005 = vld [vmem:[%s5 + $0x44] sm:$0xf]
    %v1006 = vld [vmem:[%s5 + $0x48] sm:$0xf]
    %v1007 = vld [vmem:[%s5 + $0x4c] sm:$0xf]
    %v1008 = vld [vmem:[%s5 + $0x50] sm:$0xf]
    %v1009 = vld [vmem:[%s5 + $0x54] sm:$0xf]
    %v1010 = vld [vmem:[%s5 + $0x58] sm:$0xf]
    %v1011 = vld [vmem:[%s5 + $0x5c] sm:$0xf]
    %v1012 = vld [vmem:[%s5 + $0x60] sm:$0xf]
    %v1013 = vld [vmem:[%s5 + $0x64] sm:$0xf]
    %v1014 = vld [vmem:[%s5 + $0x68] sm:$0xf]
    %v1015 = vld [vmem:[%s5 + $0x6c] sm:$0xf]
    %v1016 = vld [vmem:[%s5 + $0x70] sm:$0xf]
    %v1017 = vld [vmem:[%s5 + $0x74] sm:$0xf]
    %v1018 = vld [vmem:[%s5 + $0x78] sm:$0xf]
    %v1019 = vld [vmem:[%s5 + $0x7c] sm:$0xf]
    %v1020 = vld [vmem:[%s5 + $0x80] sm:$0xf]
    %v1021 = vld [vmem:[%s5 + $0x84] sm:$0xf]
    %v1022 = vld [vmem:[%s5 + $0x88] sm:$0xf]
    %v1023 = vld [vmem:[%s5 + $0x8c] sm:$0xf]
    %v1024 = vld [vmem:[%s5 + $0x90] sm:$0xf]
    %v1025 = vld [vmem:[%s5 + $0x94] sm:$0xf]
    %v1026 = vld [vmem:[%s5 + $0x98] sm:$0xf]
    %v1027 = vld [vmem:[%s5 + $0x9c] sm:$0xf]
    %v1028 = vld [vmem:[%s5 + $0xa0] sm:$0xf]
    %v1029 = vld [vmem:[%s5 + $0xa4] sm:$0xf]
    %v1030 = vld [vmem:[%s5 + $0xa8] sm:$0xf]
    %v1031 = vld [vmem:[%s5 + $0xac] sm:$0xf]
    %v1032 = vld [vmem:[%s5 + $0xb0] sm:$0xf]
    %v1033 = vld [vmem:[%s5 + $0xb4] sm:$0xf]
    %v1034 = vld [vmem:[%s5 + $0xb8] sm:$0xf]
    %v1035 = vld [vmem:[%s5 + $0xbc] sm:$0xf]
    %v1036 = vld [vmem:[%s5 + $0xc0] sm:$0xf]
    %v1037 = vld [vmem:[%s5 + $0xc4] sm:$0xf]
    %v1038 = vld [vmem:[%s5 + $0xc8] sm:$0xf]
    %v1039 = vld [vmem:[%s5 + $0xcc] sm:$0xf]
    %v1040 = vld [vmem:[%s5 + $0xd0] sm:$0xf]
    %v1041 = vld [vmem:[%s5 + $0xd4] sm:$0xf]
    %v1042 = vld [vmem:[%s5 + $0xd8] sm:$0xf]
    %v1043 = vld [vmem:[%s5 + $0xdc] sm:$0xf]
    %v1044 = vld [vmem:[%s5 + $0xe0] sm:$0xf]
    %v1045 = vld [vmem:[%s5 + $0xe4] sm:$0xf]
    %v1046 = vld [vmem:[%s5 + $0xe8] sm:$0xf]
    %v1047 = vld [vmem:[%s5 + $0xec] sm:$0xf]
    %v1048 = vld [vmem:[%s5 + $0xf0] sm:$0xf]
    %v1049 = vld [vmem:[%s5 + $0xf4] sm:$0xf]
    %v1050 = vld [vmem:[%s5 + $0xf8] sm:$0xf]
    %v1051 = vld [vmem:[%s5 + $0xfc] sm:$0xf]
    %v1052 = vld [vmem:[%s6] sm:$0x1]
    %v1054 = vlaneseq
    %v1055 = vshrl.u32 %v1054, 7
    %v1056 = vsub.s32 0, %v1055
    %v1057 = vrot.slane %v1052, %v1056
    %v1123 = vunpack.c.l.b16 %v988
    %v1124 = vunpack.c.l.b16 %v989
    %v1125 = vunpack.c.l.b16 %v990
    %v1126 = vunpack.c.l.b16 %v991
    %v1127 = vunpack.c.l.b16 %v992
    %v1128 = vunpack.c.l.b16 %v993
    %v1129 = vunpack.c.l.b16 %v994
    %v1130 = vunpack.c.l.b16 %v995
    %v1131 = vunpack.c.l.b16 %v996
    %v1132 = vunpack.c.l.b16 %v997
    %v1133 = vunpack.c.l.b16 %v998
    %v1134 = vunpack.c.l.b16 %v999
    %v1135 = vunpack.c.l.b16 %v1000
    %v1136 = vunpack.c.l.b16 %v1001
    %v1137 = vunpack.c.l.b16 %v1002
    %v1138 = vunpack.c.l.b16 %v1003
    %v1139 = vunpack.c.l.b16 %v1004
    %v1140 = vunpack.c.l.b16 %v1005
    %v1141 = vunpack.c.l.b16 %v1006
    %v1142 = vunpack.c.l.b16 %v1007
    %v1143 = vunpack.c.l.b16 %v1008
    %v1144 = vunpack.c.l.b16 %v1009
    %v1145 = vunpack.c.l.b16 %v1010
    %v1146 = vunpack.c.l.b16 %v1011
    %v1147 = vunpack.c.l.b16 %v1012
    %v1148 = vunpack.c.l.b16 %v1013
    %v1149 = vunpack.c.l.b16 %v1014
    %v1150 = vunpack.c.l.b16 %v1015
    %v1151 = vunpack.c.l.b16 %v1016
    %v1152 = vunpack.c.l.b16 %v1017
    %v1153 = vunpack.c.l.b16 %v1018
    %v1154 = vunpack.c.l.b16 %v1019
    %v1155 = vunpack.c.l.b16 %v1020
    %v1156 = vunpack.c.l.b16 %v1021
    %v1157 = vunpack.c.l.b16 %v1022
    %v1158 = vunpack.c.l.b16 %v1023
    %v1159 = vunpack.c.l.b16 %v1024
    %v1160 = vunpack.c.l.b16 %v1025
    %v1161 = vunpack.c.l.b16 %v1026
    %v1162 = vunpack.c.l.b16 %v1027
    %v1163 = vunpack.c.l.b16 %v1028
    %v1164 = vunpack.c.l.b16 %v1029
    %v1165 = vunpack.c.l.b16 %v1030
    %v1166 = vunpack.c.l.b16 %v1031
    %v1167 = vunpack.c.l.b16 %v1032
    %v1168 = vunpack.c.l.b16 %v1033
    %v1169 = vunpack.c.l.b16 %v1034
    %v1170 = vunpack.c.l.b16 %v1035
    %v1171 = vunpack.c.l.b16 %v1036
    %v1172 = vunpack.c.l.b16 %v1037
    %v1173 = vunpack.c.l.b16 %v1038
    %v1174 = vunpack.c.l.b16 %v1039
    %v1175 = vunpack.c.l.b16 %v1040
    %v1176 = vunpack.c.l.b16 %v1041
    %v1177 = vunpack.c.l.b16 %v1042
    %v1178 = vunpack.c.l.b16 %v1043
    %v1179 = vunpack.c.l.b16 %v1044
    %v1180 = vunpack.c.l.b16 %v1045
    %v1181 = vunpack.c.l.b16 %v1046
    %v1182 = vunpack.c.l.b16 %v1047
    %v1183 = vunpack.c.l.b16 %v1048
    %v1184 = vunpack.c.l.b16 %v1049
    %v1185 = vunpack.c.l.b16 %v1050
    %v1186 = vunpack.c.l.b16 %v1051
    %v1187 = vpack.c.b16 %v1124, %v1123
    %v1188 = vpack.c.b16 %v1126, %v1125
    %v1189 = vpack.c.b16 %v1128, %v1127
    %v1190 = vpack.c.b16 %v1130, %v1129
    %v1191 = vpack.c.b16 %v1132, %v1131
    %v1192 = vpack.c.b16 %v1134, %v1133
    %v1193 = vpack.c.b16 %v1136, %v1135
    %v1194 = vpack.c.b16 %v1138, %v1137
    %v1195 = vpack.c.b16 %v1140, %v1139
    %v1196 = vpack.c.b16 %v1142, %v1141
    %v1197 = vpack.c.b16 %v1144, %v1143
    %v1198 = vpack.c.b16 %v1146, %v1145
    %v1199 = vpack.c.b16 %v1148, %v1147
    %v1200 = vpack.c.b16 %v1150, %v1149
    %v1201 = vpack.c.b16 %v1152, %v1151
    %v1202 = vpack.c.b16 %v1154, %v1153
    %v1203 = vpack.c.b16 %v1156, %v1155
    %v1204 = vpack.c.b16 %v1158, %v1157
    %v1205 = vpack.c.b16 %v1160, %v1159
    %v1206 = vpack.c.b16 %v1162, %v1161
    %v1207 = vpack.c.b16 %v1164, %v1163
    %v1208 = vpack.c.b16 %v1166, %v1165
    %v1209 = vpack.c.b16 %v1168, %v1167
    %v1210 = vpack.c.b16 %v1170, %v1169
    %v1211 = vpack.c.b16 %v1172, %v1171
    %v1212 = vpack.c.b16 %v1174, %v1173
    %v1213 = vpack.c.b16 %v1176, %v1175
    %v1214 = vpack.c.b16 %v1178, %v1177
    %v1215 = vpack.c.b16 %v1180, %v1179
    %v1216 = vpack.c.b16 %v1182, %v1181
    %v1217 = vpack.c.b16 %v1184, %v1183
    %v1218 = vpack.c.b16 %v1186, %v1185
    %1251 = vmatprep.subr.bf16.mxu0 0
    %1252 = vmatpush1.bf16.msra.mxu0 %v1187
    %1253 = vmatprep.subr.bf16.mxu0 0
    %1254 = vmatpush1.bf16.msra.mxu0 %v1188
    %1255 = vmatprep.subr.bf16.mxu0 0
    %1256 = vmatpush1.bf16.msra.mxu0 %v1189
    %1257 = vmatprep.subr.bf16.mxu0 0
    %1258 = vmatpush1.bf16.msra.mxu0 %v1190
    %1259 = vmatprep.subr.bf16.mxu0 0
    %1260 = vmatpush1.bf16.msra.mxu0 %v1191
    %1261 = vmatprep.subr.bf16.mxu0 0
    %1262 = vmatpush1.bf16.msra.mxu0 %v1192
    %1263 = vmatprep.subr.bf16.mxu0 0
    %1264 = vmatpush1.bf16.msra.mxu0 %v1193
    %1265 = vmatprep.subr.bf16.mxu0 0
    %1266 = vmatpush1.bf16.msra.mxu0 %v1194
    %1267 = vmatprep.subr.bf16.mxu0 0
    %1268 = vmatpush1.bf16.msra.mxu0 %v1195
    %1269 = vmatprep.subr.bf16.mxu0 0
    %1270 = vmatpush1.bf16.msra.mxu0 %v1196
    %1271 = vmatprep.subr.bf16.mxu0 0
    %1272 = vmatpush1.bf16.msra.mxu0 %v1197
    %1273 = vmatprep.subr.bf16.mxu0 0
    %1274 = vmatpush1.bf16.msra.mxu0 %v1198
    %1275 = vmatprep.subr.bf16.mxu0 0
    %1276 = vmatpush1.bf16.msra.mxu0 %v1199
    %1277 = vmatprep.subr.bf16.mxu0 0
    %1278 = vmatpush1.bf16.msra.mxu0 %v1200
    %1279 = vmatprep.subr.bf16.mxu0 0
    %1280 = vmatpush1.bf16.msra.mxu0 %v1201
    %1281 = vmatprep.subr.bf16.mxu0 0
    %1282 = vmatpush1.bf16.msra.mxu0 %v1202
    %1283 = vmatprep.mubr.bf16.mxu0 %v985
    %1284 = vmatmul.mubr.bf16.gmra.mrb[0].mxu0 %v984
    %v1285 = vpop.f32.mrb[0].mxu0
    %v1286 = vadd.f32 %v1057, %v1285
    %v1287 = vpop.f32.mrb[0].mxu0
    %v1288 = vpop.f32.mrb[0].mxu0
    %v1289 = vadd.f32 %v1057, %v1288
    %v1290 = vpop.f32.mrb[0].mxu0
    %1291 = vdwg.mxu0
    %1292 = vmatprep.subr.bf16.mxu0 0
    %1293 = vmatpush1.bf16.msra.mxu0 %v1203
    %1294 = vmatprep.subr.bf16.mxu0 0
    %1295 = vmatpush1.bf16.msra.mxu0 %v1204
    %1296 = vmatprep.subr.bf16.mxu0 0
    %1297 = vmatpush1.bf16.msra.mxu0 %v1205
    %1298 = vmatprep.subr.bf16.mxu0 0
    %1299 = vmatpush1.bf16.msra.mxu0 %v1206
    %1300 = vmatprep.subr.bf16.mxu0 0
    %1301 = vmatpush1.bf16.msra.mxu0 %v1207
    %1302 = vmatprep.subr.bf16.mxu0 0
    %1303 = vmatpush1.bf16.msra.mxu0 %v1208
    %1304 = vmatprep.subr.bf16.mxu0 0
    %1305 = vmatpush1.bf16.msra.mxu0 %v1209
    %1306 = vmatprep.subr.bf16.mxu0 0
    %1307 = vmatpush1.bf16.msra.mxu0 %v1210
    %1308 = vmatprep.subr.bf16.mxu0 0
    %1309 = vmatpush1.bf16.msra.mxu0 %v1211
    %1310 = vmatprep.subr.bf16.mxu0 0
    %1311 = vmatpush1.bf16.msra.mxu0 %v1212
    %1312 = vmatprep.subr.bf16.mxu0 0
    %1313 = vmatpush1.bf16.msra.mxu0 %v1213
    %1314 = vmatprep.subr.bf16.mxu0 0
    %1315 = vmatpush1.bf16.msra.mxu0 %v1214
    %1316 = vmatprep.subr.bf16.mxu0 0
    %1317 = vmatpush1.bf16.msra.mxu0 %v1215
    %1318 = vmatprep.subr.bf16.mxu0 0
    %1319 = vmatpush1.bf16.msra.mxu0 %v1216
    %1320 = vmatprep.subr.bf16.mxu0 0
    %1321 = vmatpush1.bf16.msra.mxu0 %v1217
    %1322 = vmatprep.subr.bf16.mxu0 0
    %1323 = vmatpush1.bf16.msra.mxu0 %v1218
    %1324 = vmatprep.mubr.bf16.mxu0 %v987
    %1325 = vmatmul.mubr.bf16.gmra.mrb[0].mxu0 %v986
    %v1326 = vpop.f32.mrb[0].mxu0
    %v1327 = vadd.f32 %v1286, %v1326
    %v1328 = vpop.f32.mrb[0].mxu0
    %v1329 = vpop.f32.mrb[0].mxu0
    %v1330 = vadd.f32 %v1289, %v1329
    %v1331 = vpop.f32.mrb[0].mxu0
    %1332 = vdwg.mxu0
    %v1333 = vtanh.pop %v1327
    %v1334 = vtanh.pop %v1330
    %v1335 = vld [vmem:[%s7] sm:$0x1]
    %v1337 = vlaneseq
    %v1338 = vshrl.u32 %v1337, 7
    %v1339 = vsub.s32 0, %v1338
    %v1340 = vrot.slane %v1335, %v1339
    %v1342 = vmul.f32 %v1333, %v1340
    %v1343 = vmul.f32 %v1334, %v1340
    %v1344 = vsel %vm253, %v1342, 0.0
    %1345 = vadd.xlane.f32.xlu0 %v1344
    %v1346 = vpop.xlane.xlu0 %1345
    %v1347 = vsel %vm253, %v1343, 0.0
    %1348 = vadd.xlane.f32.xlu0 %v1347
    %v1349 = vpop.xlane.xlu0 %1348
    %v1350 = vld [vmem:[#allocation4] sm:$0x1]
    %v1352 = vlaneseq
    %v1353 = vshrl.u32 %v1352, 7
    %v1354 = vsub.s32 0, %v1353
    %v1355 = vrot.slane %v1350, %v1354
    %v1357 = vadd.f32 %v1346, %v1355
    %v1358 = vadd.f32 %v1349, %v1355
    %v1359 = vmul.f32 %v1357, 1.442695
    %v1360 = vpow.pop %v1359
    %v1361 = vmul.f32 %v1358, 1.442695
    %v1362 = vpow.pop %v1361
    %v1363 = vld [vmem:[%s2] sm:$0xff]
    %v1364 = vld [vmem:[%s2 + $0x8] sm:$0xff]
    %v1365 = vmul.f32 %v1360, %v1363
    %v1366 = vmul.f32 %v1362, %v1364
    %1368 = vset.pattern.permute.xlu0 0
    %1369 = vperm.xlu0 %1368, %v1365
    %v1370 = vpop.permute.xlu0 %1369
    %1373 = vset.pattern.permute.xlu0 0
    %1374 = vperm.xlu0 %1373, %v1366
    %v1375 = vpop.permute.xlu0 %1374
    %v1377 = vmul.f32 %v976, %v1370
    %v1378 = vmul.f32 %v977, %v1370
    %v1379 = vmul.f32 %v978, %v1370
    %v1380 = vmul.f32 %v979, %v1370
    %v1381 = vmul.f32 %v980, %v1375
    %v1382 = vmul.f32 %v981, %v1375
    %v1383 = vmul.f32 %v982, %v1375
    %v1384 = vmul.f32 %v983, %v1375
    %v1385 = vrot.slane %v1377, 4
    %v1386 = vadd.f32 %v1377, %v1385
    %v1387 = vrot.slane %v1386, 2
    %v1388 = vadd.f32 %v1386, %v1387
    %v1389 = vrot.slane %v1388, 1
    %v1390 = vadd.f32 %v1388, %v1389
    %v1391 = vrot.slane %v1378, 4
    %v1392 = vadd.f32 %v1378, %v1391
    %v1393 = vrot.slane %v1392, 2
    %v1394 = vadd.f32 %v1392, %v1393
    %v1395 = vrot.slane %v1394, 1
    %v1396 = vadd.f32 %v1394, %v1395
    %v1397 = vrot.slane %v1379, 4
    %v1398 = vadd.f32 %v1379, %v1397
    %v1399 = vrot.slane %v1398, 2
    %v1400 = vadd.f32 %v1398, %v1399
    %v1401 = vrot.slane %v1400, 1
    %v1402 = vadd.f32 %v1400, %v1401
    %v1403 = vrot.slane %v1380, 4
    %v1404 = vadd.f32 %v1380, %v1403
    %v1405 = vrot.slane %v1404, 2
    %v1406 = vadd.f32 %v1404, %v1405
    %v1407 = vrot.slane %v1406, 1
    %v1408 = vadd.f32 %v1406, %v1407
    %v1409 = vrot.slane %v1381, 4
    %v1410 = vadd.f32 %v1381, %v1409
    %v1411 = vrot.slane %v1410, 2
    %v1412 = vadd.f32 %v1410, %v1411
    %v1413 = vrot.slane %v1412, 1
    %v1414 = vadd.f32 %v1412, %v1413
    %v1415 = vrot.slane %v1382, 4
    %v1416 = vadd.f32 %v1382, %v1415
    %v1417 = vrot.slane %v1416, 2
    %v1418 = vadd.f32 %v1416, %v1417
    %v1419 = vrot.slane %v1418, 1
    %v1420 = vadd.f32 %v1418, %v1419
    %v1421 = vrot.slane %v1383, 4
    %v1422 = vadd.f32 %v1383, %v1421
    %v1423 = vrot.slane %v1422, 2
    %v1424 = vadd.f32 %v1422, %v1423
    %v1425 = vrot.slane %v1424, 1
    %v1426 = vadd.f32 %v1424, %v1425
    %v1427 = vrot.slane %v1384, 4
    %v1428 = vadd.f32 %v1384, %v1427
    %v1429 = vrot.slane %v1428, 2
    %v1430 = vadd.f32 %v1428, %v1429
    %v1431 = vrot.slane %v1430, 1
    %v1432 = vadd.f32 %v1430, %v1431
    %vm1433 = vcmask 7168
    %v1434 = vsel %vm1433, %v1365, 0.0
    %v1435 = vrot.slane %v1434, 4
    %v1436 = vadd.f32 %v1434, %v1435
    %v1437 = vrot.slane %v1436, 2
    %v1438 = vadd.f32 %v1436, %v1437
    %v1439 = vrot.slane %v1438, 1
    %v1440 = vadd.f32 %v1438, %v1439
    %v1441 = vsel %vm1433, %v1366, 0.0
    %v1442 = vrot.slane %v1441, 4
    %v1443 = vadd.f32 %v1441, %v1442
    %v1444 = vrot.slane %v1443, 2
    %v1445 = vadd.f32 %v1443, %v1444
    %v1446 = vrot.slane %v1445, 1
    %v1447 = vadd.f32 %v1445, %v1446
    %v1448 = vadd.f32 %v1440, 1e-08
    %v1449 = vadd.f32 %v1447, 1e-08
    %v1450 = vpack.c.bf16 %v1390, %v1390
    %v1451 = vpack.c.bf16 %v1396, %v1396
    %v1452 = vpack.c.bf16 %v1402, %v1402
    %v1453 = vpack.c.bf16 %v1408, %v1408
    %v1454 = vpack.c.bf16 %v1414, %v1414
    %v1455 = vpack.c.bf16 %v1420, %v1420
    %v1456 = vpack.c.bf16 %v1426, %v1426
    %v1457 = vpack.c.bf16 %v1432, %v1432
    %v1458 = vld [vmem:[%s9] sm:$0xf]
    %v1459 = vld [vmem:[%s9 + $0x4] sm:$0xf]
    %v1460 = vld [vmem:[%s9 + $0x8] sm:$0xf]
    %v1461 = vld [vmem:[%s9 + $0xc] sm:$0xf]
    %v1462 = vld [vmem:[%s9 + $0x10] sm:$0xf]
    %v1463 = vld [vmem:[%s9 + $0x14] sm:$0xf]
    %v1464 = vld [vmem:[%s9 + $0x18] sm:$0xf]
    %v1465 = vld [vmem:[%s9 + $0x1c] sm:$0xf]
    %v1466 = vld [vmem:[%s9 + $0x20] sm:$0xf]
    %v1467 = vld [vmem:[%s9 + $0x24] sm:$0xf]
    %v1468 = vld [vmem:[%s9 + $0x28] sm:$0xf]
    %v1469 = vld [vmem:[%s9 + $0x2c] sm:$0xf]
    %v1470 = vld [vmem:[%s9 + $0x30] sm:$0xf]
    %v1471 = vld [vmem:[%s9 + $0x34] sm:$0xf]
    %v1472 = vld [vmem:[%s9 + $0x38] sm:$0xf]
    %v1473 = vld [vmem:[%s9 + $0x3c] sm:$0xf]
    %v1474 = vld [vmem:[%s9 + $0x40] sm:$0xf]
    %v1475 = vld [vmem:[%s9 + $0x44] sm:$0xf]
    %v1476 = vld [vmem:[%s9 + $0x48] sm:$0xf]
    %v1477 = vld [vmem:[%s9 + $0x4c] sm:$0xf]
    %v1478 = vld [vmem:[%s9 + $0x50] sm:$0xf]
    %v1479 = vld [vmem:[%s9 + $0x54] sm:$0xf]
    %v1480 = vld [vmem:[%s9 + $0x58] sm:$0xf]
    %v1481 = vld [vmem:[%s9 + $0x5c] sm:$0xf]
    %v1482 = vld [vmem:[%s9 + $0x60] sm:$0xf]
    %v1483 = vld [vmem:[%s9 + $0x64] sm:$0xf]
    %v1484 = vld [vmem:[%s9 + $0x68] sm:$0xf]
    %v1485 = vld [vmem:[%s9 + $0x6c] sm:$0xf]
    %v1486 = vld [vmem:[%s9 + $0x70] sm:$0xf]
    %v1487 = vld [vmem:[%s9 + $0x74] sm:$0xf]
    %v1488 = vld [vmem:[%s9 + $0x78] sm:$0xf]
    %v1489 = vld [vmem:[%s9 + $0x7c] sm:$0xf]
    %v1490 = vld [vmem:[%s9 + $0x80] sm:$0xf]
    %v1491 = vld [vmem:[%s9 + $0x84] sm:$0xf]
    %v1492 = vld [vmem:[%s9 + $0x88] sm:$0xf]
    %v1493 = vld [vmem:[%s9 + $0x8c] sm:$0xf]
    %v1494 = vld [vmem:[%s9 + $0x90] sm:$0xf]
    %v1495 = vld [vmem:[%s9 + $0x94] sm:$0xf]
    %v1496 = vld [vmem:[%s9 + $0x98] sm:$0xf]
    %v1497 = vld [vmem:[%s9 + $0x9c] sm:$0xf]
    %v1498 = vld [vmem:[%s9 + $0xa0] sm:$0xf]
    %v1499 = vld [vmem:[%s9 + $0xa4] sm:$0xf]
    %v1500 = vld [vmem:[%s9 + $0xa8] sm:$0xf]
    %v1501 = vld [vmem:[%s9 + $0xac] sm:$0xf]
    %v1502 = vld [vmem:[%s9 + $0xb0] sm:$0xf]
    %v1503 = vld [vmem:[%s9 + $0xb4] sm:$0xf]
    %v1504 = vld [vmem:[%s9 + $0xb8] sm:$0xf]
    %v1505 = vld [vmem:[%s9 + $0xbc] sm:$0xf]
    %v1506 = vld [vmem:[%s9 + $0xc0] sm:$0xf]
    %v1507 = vld [vmem:[%s9 + $0xc4] sm:$0xf]
    %v1508 = vld [vmem:[%s9 + $0xc8] sm:$0xf]
    %v1509 = vld [vmem:[%s9 + $0xcc] sm:$0xf]
    %v1510 = vld [vmem:[%s9 + $0xd0] sm:$0xf]
    %v1511 = vld [vmem:[%s9 + $0xd4] sm:$0xf]
    %v1512 = vld [vmem:[%s9 + $0xd8] sm:$0xf]
    %v1513 = vld [vmem:[%s9 + $0xdc] sm:$0xf]
    %v1514 = vld [vmem:[%s9 + $0xe0] sm:$0xf]
    %v1515 = vld [vmem:[%s9 + $0xe4] sm:$0xf]
    %v1516 = vld [vmem:[%s9 + $0xe8] sm:$0xf]
    %v1517 = vld [vmem:[%s9 + $0xec] sm:$0xf]
    %v1518 = vld [vmem:[%s9 + $0xf0] sm:$0xf]
    %v1519 = vld [vmem:[%s9 + $0xf4] sm:$0xf]
    %v1520 = vld [vmem:[%s9 + $0xf8] sm:$0xf]
    %v1521 = vld [vmem:[%s9 + $0xfc] sm:$0xf]
    %v1530 = vunpack.c.l.b16 %v1450
    %v1531 = vunpack.c.l.b16 %v1451
    %v1532 = vunpack.c.l.b16 %v1452
    %v1533 = vunpack.c.l.b16 %v1453
    %v1534 = vunpack.c.l.b16 %v1454
    %v1535 = vunpack.c.l.b16 %v1455
    %v1536 = vunpack.c.l.b16 %v1456
    %v1537 = vunpack.c.l.b16 %v1457
    %vm1538 = vcmask 1041409
    %v1539 = vsel %vm1538, %v1534, %v1530
    %v1540 = vsel %vm1538, %v1535, %v1531
    %v1541 = vsel %vm1538, %v1536, %v1532
    %v1542 = vsel %vm1538, %v1537, %v1533
    %v1543 = vpack.c.b16 %v1539, %v1539
    %v1544 = vpack.c.b16 %v1540, %v1540
    %v1545 = vpack.c.b16 %v1541, %v1541
    %v1546 = vpack.c.b16 %v1542, %v1542
    %v1615 = vunpack.c.l.b16 %v1458
    %v1616 = vunpack.c.l.b16 %v1459
    %v1617 = vunpack.c.l.b16 %v1460
    %v1618 = vunpack.c.l.b16 %v1461
    %v1619 = vunpack.c.l.b16 %v1462
    %v1620 = vunpack.c.l.b16 %v1463
    %v1621 = vunpack.c.l.b16 %v1464
    %v1622 = vunpack.c.l.b16 %v1465
    %v1623 = vunpack.c.l.b16 %v1466
    %v1624 = vunpack.c.l.b16 %v1467
    %v1625 = vunpack.c.l.b16 %v1468
    %v1626 = vunpack.c.l.b16 %v1469
    %v1627 = vunpack.c.l.b16 %v1470
    %v1628 = vunpack.c.l.b16 %v1471
    %v1629 = vunpack.c.l.b16 %v1472
    %v1630 = vunpack.c.l.b16 %v1473
    %v1631 = vunpack.c.l.b16 %v1474
    %v1632 = vunpack.c.l.b16 %v1475
    %v1633 = vunpack.c.l.b16 %v1476
    %v1634 = vunpack.c.l.b16 %v1477
    %v1635 = vunpack.c.l.b16 %v1478
    %v1636 = vunpack.c.l.b16 %v1479
    %v1637 = vunpack.c.l.b16 %v1480
    %v1638 = vunpack.c.l.b16 %v1481
    %v1639 = vunpack.c.l.b16 %v1482
    %v1640 = vunpack.c.l.b16 %v1483
    %v1641 = vunpack.c.l.b16 %v1484
    %v1642 = vunpack.c.l.b16 %v1485
    %v1643 = vunpack.c.l.b16 %v1486
    %v1644 = vunpack.c.l.b16 %v1487
    %v1645 = vunpack.c.l.b16 %v1488
    %v1646 = vunpack.c.l.b16 %v1489
    %v1647 = vunpack.c.l.b16 %v1490
    %v1648 = vunpack.c.l.b16 %v1491
    %v1649 = vunpack.c.l.b16 %v1492
    %v1650 = vunpack.c.l.b16 %v1493
    %v1651 = vunpack.c.l.b16 %v1494
    %v1652 = vunpack.c.l.b16 %v1495
    %v1653 = vunpack.c.l.b16 %v1496
    %v1654 = vunpack.c.l.b16 %v1497
    %v1655 = vunpack.c.l.b16 %v1498
    %v1656 = vunpack.c.l.b16 %v1499
    %v1657 = vunpack.c.l.b16 %v1500
    %v1658 = vunpack.c.l.b16 %v1501
    %v1659 = vunpack.c.l.b16 %v1502
    %v1660 = vunpack.c.l.b16 %v1503
    %v1661 = vunpack.c.l.b16 %v1504
    %v1662 = vunpack.c.l.b16 %v1505
    %v1663 = vunpack.c.l.b16 %v1506
    %v1664 = vunpack.c.l.b16 %v1507
    %v1665 = vunpack.c.l.b16 %v1508
    %v1666 = vunpack.c.l.b16 %v1509
    %v1667 = vunpack.c.l.b16 %v1510
    %v1668 = vunpack.c.l.b16 %v1511
    %v1669 = vunpack.c.l.b16 %v1512
    %v1670 = vunpack.c.l.b16 %v1513
    %v1671 = vunpack.c.l.b16 %v1514
    %v1672 = vunpack.c.l.b16 %v1515
    %v1673 = vunpack.c.l.b16 %v1516
    %v1674 = vunpack.c.l.b16 %v1517
    %v1675 = vunpack.c.l.b16 %v1518
    %v1676 = vunpack.c.l.b16 %v1519
    %v1677 = vunpack.c.l.b16 %v1520
    %v1678 = vunpack.c.l.b16 %v1521
    %v1679 = vpack.c.b16 %v1616, %v1615
    %v1680 = vpack.c.b16 %v1618, %v1617
    %v1681 = vpack.c.b16 %v1620, %v1619
    %v1682 = vpack.c.b16 %v1622, %v1621
    %v1683 = vpack.c.b16 %v1624, %v1623
    %v1684 = vpack.c.b16 %v1626, %v1625
    %v1685 = vpack.c.b16 %v1628, %v1627
    %v1686 = vpack.c.b16 %v1630, %v1629
    %v1687 = vpack.c.b16 %v1632, %v1631
    %v1688 = vpack.c.b16 %v1634, %v1633
    %v1689 = vpack.c.b16 %v1636, %v1635
    %v1690 = vpack.c.b16 %v1638, %v1637
    %v1691 = vpack.c.b16 %v1640, %v1639
    %v1692 = vpack.c.b16 %v1642, %v1641
    %v1693 = vpack.c.b16 %v1644, %v1643
    %v1694 = vpack.c.b16 %v1646, %v1645
    %v1695 = vpack.c.b16 %v1648, %v1647
    %v1696 = vpack.c.b16 %v1650, %v1649
    %v1697 = vpack.c.b16 %v1652, %v1651
    %v1698 = vpack.c.b16 %v1654, %v1653
    %v1699 = vpack.c.b16 %v1656, %v1655
    %v1700 = vpack.c.b16 %v1658, %v1657
    %v1701 = vpack.c.b16 %v1660, %v1659
    %v1702 = vpack.c.b16 %v1662, %v1661
    %v1703 = vpack.c.b16 %v1664, %v1663
    %v1704 = vpack.c.b16 %v1666, %v1665
    %v1705 = vpack.c.b16 %v1668, %v1667
    %v1706 = vpack.c.b16 %v1670, %v1669
    %v1707 = vpack.c.b16 %v1672, %v1671
    %v1708 = vpack.c.b16 %v1674, %v1673
    %v1709 = vpack.c.b16 %v1676, %v1675
    %v1710 = vpack.c.b16 %v1678, %v1677
    %1743 = vmatprep.subr.bf16.mxu0 0
    %1744 = vmatpush1.bf16.msra.mxu0 %v1679
    %1745 = vmatprep.subr.bf16.mxu0 0
    %1746 = vmatpush1.bf16.msra.mxu0 %v1680
    %1747 = vmatprep.subr.bf16.mxu0 0
    %1748 = vmatpush1.bf16.msra.mxu0 %v1681
    %1749 = vmatprep.subr.bf16.mxu0 0
    %1750 = vmatpush1.bf16.msra.mxu0 %v1682
    %1751 = vmatprep.subr.bf16.mxu0 0
    %1752 = vmatpush1.bf16.msra.mxu0 %v1683
    %1753 = vmatprep.subr.bf16.mxu0 0
    %1754 = vmatpush1.bf16.msra.mxu0 %v1684
    %1755 = vmatprep.subr.bf16.mxu0 0
    %1756 = vmatpush1.bf16.msra.mxu0 %v1685
    %1757 = vmatprep.subr.bf16.mxu0 0
    %1758 = vmatpush1.bf16.msra.mxu0 %v1686
    %1759 = vmatprep.subr.bf16.mxu0 0
    %1760 = vmatpush1.bf16.msra.mxu0 %v1687
    %1761 = vmatprep.subr.bf16.mxu0 0
    %1762 = vmatpush1.bf16.msra.mxu0 %v1688
    %1763 = vmatprep.subr.bf16.mxu0 0
    %1764 = vmatpush1.bf16.msra.mxu0 %v1689
    %1765 = vmatprep.subr.bf16.mxu0 0
    %1766 = vmatpush1.bf16.msra.mxu0 %v1690
    %1767 = vmatprep.subr.bf16.mxu0 0
    %1768 = vmatpush1.bf16.msra.mxu0 %v1691
    %1769 = vmatprep.subr.bf16.mxu0 0
    %1770 = vmatpush1.bf16.msra.mxu0 %v1692
    %1771 = vmatprep.subr.bf16.mxu0 0
    %1772 = vmatpush1.bf16.msra.mxu0 %v1693
    %1773 = vmatprep.subr.bf16.mxu0 0
    %1774 = vmatpush1.bf16.msra.mxu0 %v1694
    %1775 = vmatprep.mubr.bf16.mxu0 %v1544
    %1776 = vmatmul.mubr.bf16.gmra.mrb[0].mxu0 %v1543
    %v1777 = vpop.f32.mrb[0].mxu0
    %v1778 = vadd.f32 0.0, %v1777
    %v1779 = vpop.f32.mrb[0].mxu0
    %v1780 = vpop.f32.mrb[0].mxu0
    %v1781 = vpop.f32.mrb[0].mxu0
    %1782 = vdwg.mxu0
    %1783 = vmatprep.subr.bf16.mxu0 0
    %1784 = vmatpush1.bf16.msra.mxu0 %v1695
    %1785 = vmatprep.subr.bf16.mxu0 0
    %1786 = vmatpush1.bf16.msra.mxu0 %v1696
    %1787 = vmatprep.subr.bf16.mxu0 0
    %1788 = vmatpush1.bf16.msra.mxu0 %v1697
    %1789 = vmatprep.subr.bf16.mxu0 0
    %1790 = vmatpush1.bf16.msra.mxu0 %v1698
    %1791 = vmatprep.subr.bf16.mxu0 0
    %1792 = vmatpush1.bf16.msra.mxu0 %v1699
    %1793 = vmatprep.subr.bf16.mxu0 0
    %1794 = vmatpush1.bf16.msra.mxu0 %v1700
    %1795 = vmatprep.subr.bf16.mxu0 0
    %1796 = vmatpush1.bf16.msra.mxu0 %v1701
    %1797 = vmatprep.subr.bf16.mxu0 0
    %1798 = vmatpush1.bf16.msra.mxu0 %v1702
    %1799 = vmatprep.subr.bf16.mxu0 0
    %1800 = vmatpush1.bf16.msra.mxu0 %v1703
    %1801 = vmatprep.subr.bf16.mxu0 0
    %1802 = vmatpush1.bf16.msra.mxu0 %v1704
    %1803 = vmatprep.subr.bf16.mxu0 0
    %1804 = vmatpush1.bf16.msra.mxu0 %v1705
    %1805 = vmatprep.subr.bf16.mxu0 0
    %1806 = vmatpush1.bf16.msra.mxu0 %v1706
    %1807 = vmatprep.subr.bf16.mxu0 0
    %1808 = vmatpush1.bf16.msra.mxu0 %v1707
    %1809 = vmatprep.subr.bf16.mxu0 0
    %1810 = vmatpush1.bf16.msra.mxu0 %v1708
    %1811 = vmatprep.subr.bf16.mxu0 0
    %1812 = vmatpush1.bf16.msra.mxu0 %v1709
    %1813 = vmatprep.subr.bf16.mxu0 0
    %1814 = vmatpush1.bf16.msra.mxu0 %v1710
    %1815 = vmatprep.mubr.bf16.mxu0 %v1546
    %1816 = vmatmul.mubr.bf16.gmra.mrb[0].mxu0 %v1545
    %v1817 = vpop.f32.mrb[0].mxu0
    %v1818 = vadd.f32 %v1778, %v1817
    %v1819 = vpop.f32.mrb[0].mxu0
    %v1820 = vpop.f32.mrb[0].mxu0
    %v1821 = vpop.f32.mrb[0].mxu0
    %1822 = vdwg.mxu0
    %v1823 = vrcp.pop %v1448
    %v1824 = vrcp.pop %v1449
    %1826 = vset.pattern.permute.xlu0 0
    %1827 = vperm.xlu0 %1826, %v1823
    %v1828 = vpop.permute.xlu0 %1827
    %1830 = vset.pattern.permute.xlu0 0
    %1831 = vperm.xlu0 %1830, %v1824
    %v1832 = vpop.permute.xlu0 %1831
    %v1833 = vsel %vm1538, %v1832, %v1828
    %v1835 = vmul.f32 %v1818, %v1833
    %v1836 = vld [vmem:[%s10] sm:$0x1]
    %v1838 = vlaneseq
    %v1839 = vshrl.u32 %v1838, 7
    %v1840 = vsub.s32 0, %v1839
    %v1841 = vrot.slane %v1836, %v1840
    %v1843 = vadd.f32 %v1835, %v1841
    %vm1844 = vcmask 254976
    %1845 = vst.msk [vmem:[#allocation5] sm:$0x3] %vm1844, %v1843
    // Predicated region
    $region53: #{tpu_custom_call.1} parent=1 // pred_check
      _
    $region54: #{tpu_custom_call.1} parent=1 // pred_check_branch
      %1847 = sbr.rel (0) target = $region56
    $region55: #{tpu_custom_call.1} parent=1 // pred_region
      %s1849 = ssub.s32 32, 32
      %1850 = vsyncadd [#allocation6], %s1849
      %s1852 = sshll.u32 [#allocation5], 4
      %s1853 = int_to_ptr.vmem [resolvable:$true] %s1852
      %1855 = dma.vmem_to_hbm [thread:$0]  %s1853, 32, %s11, [#allocation6]
    $region56: #{tpu_custom_call.1} parent=1 // pred_fallthru
      _
    // Predicated region
    $region57: #{tpu_custom_call.1} parent=1 // pred_check
      _
    $region58: #{tpu_custom_call.1} parent=1 // pred_check_branch
      %1857 = sbr.rel (0) target = $region60
    $region59: #{tpu_custom_call.1} parent=1 // pred_region
      %1858 = dma.done [#allocation6], 32
    $region60: #{tpu_custom_call.1} parent=1 // pred_fallthru
      _
    %1859 = vsyncpa [#allocation6], 1

</llo_original>
